<compile_context>
chip_gen: v5e
topology: v5e:2x2
jax: 0.10.0
libtpu: 0.0.40
codegen_flags: <defaults>
</compile_context>

<pallas_src>
import functools
import math

import jax
import jax.numpy as jnp
from jax import lax
from jax.experimental import pallas as pl
from jax.experimental.pallas import tpu as pltpu


def _pick_tile(n, target, align):
    """Largest divisor of n that is <= target and a multiple of `align`.

    Falls back to the full dimension (always a legal block size)."""
    t = min(n, target)
    if t == n:
        return n
    for c in range(t, 0, -1):
        if n % c == 0 and c % align == 0:
            return c
    return n


# ---------------------------------------------------------------------------
# Kernel 1: fused KQV projection (all heads at once, one pass over x).
#   grid = (row tiles, Dout tiles); x tile stays resident across the inner
#   Dout axis while bf16 weight column-blocks stream through double buffers.
# ---------------------------------------------------------------------------
def _qkv_proj_kernel(x_ref, wk_ref, wq_ref, wv_ref, bk_ref, bq_ref, bv_ref,
                     k_ref, q_ref, v_ref):
    x = x_ref[...].astype(jnp.bfloat16)                      # (TM, D)

    def proj(w_ref, b_ref):
        acc = jnp.dot(x, w_ref[...],                         # bf16 MXU, f32 accum
                      preferred_element_type=jnp.float32)
        return acc + b_ref[...]                              # bias add in f32

    k_ref[...] = proj(wk_ref, bk_ref).astype(k_ref.dtype)
    q_ref[...] = proj(wq_ref, bq_ref).astype(q_ref.dtype)
    v_ref[...] = proj(wv_ref, bv_ref).astype(v_ref.dtype)


def _qkv_projection(x, wk, wq, wv, bk, bq, bv, *, block_m=512, block_d=512,
                    out_dtype=jnp.bfloat16):
    M, D = x.shape                    # x: (B*N, D) flattened token axis
    Dout = wk.shape[1]
    tm = _pick_tile(M, block_m, 8)
    td = _pick_tile(Dout, block_d, 128)
    grid = (M // tm, Dout // td)
    out = jax.ShapeDtypeStruct((M, Dout), out_dtype)

    x_spec = pl.BlockSpec((tm, D), lambda i, j: (i, 0))      # resident across j
    w_spec = pl.BlockSpec((D, td), lambda i, j: (0, j))      # streamed weight cols
    b_spec = pl.BlockSpec((1, td), lambda i, j: (0, j))
    o_spec = pl.BlockSpec((tm, td), lambda i, j: (i, j))

    return pl.pallas_call(
        _qkv_proj_kernel,
        out_shape=(out, out, out),
        grid_spec=pltpu.PrefetchScalarGridSpec(
            num_scalar_prefetch=0,
            grid=grid,
            in_specs=[x_spec, w_spec, w_spec, w_spec, b_spec, b_spec, b_spec],
            out_specs=[o_spec, o_spec, o_spec],
        ),
        compiler_params=pltpu.CompilerParams(
            dimension_semantics=("parallel", "parallel"),
            vmem_limit_bytes=32 * 1024 * 1024,
        ),
    )(x, wk, wq, wv, bk, bq, bv)


# ---------------------------------------------------------------------------
# Kernel 2: flash-style causal attention with online softmax over a
# lower-triangular (qi, ki) schedule (no dead steps, no wasted K/V DMA).
# q is pre-scaled by 1/sqrt(dh) in the projection, so no score scaling here.
# ---------------------------------------------------------------------------
def _flash_attn_kernel(qi_map_ref, ki_map_ref, q_ref, k_ref, v_ref, o_ref,
                       m_sc, l_sc, acc_sc, *, block_q, block_k):
    s_idx = pl.program_id(2)
    qi = qi_map_ref[s_idx]
    ki = ki_map_ref[s_idx]

    @pl.when(ki == 0)
    def _():
        m_sc[...] = jnp.full_like(m_sc, -jnp.inf)
        l_sc[...] = jnp.zeros_like(l_sc)
        acc_sc[...] = jnp.zeros_like(acc_sc)

    def online_softmax_update(apply_causal_mask):
        q = q_ref[...].astype(jnp.bfloat16)                  # (TQ, dh), pre-scaled
        k = k_ref[...].astype(jnp.bfloat16)                  # (TK, dh)
        # Contract over dh directly -- no explicit k.T (no XLU transpose).
        s = lax.dot_general(q, k,
                            dimension_numbers=(((1,), (1,)), ((), ())),
                            preferred_element_type=jnp.float32)   # (TQ, TK) f32
        if apply_causal_mask:   # only diagonal-crossing blocks pay the iota/select
            row = qi * block_q + lax.broadcasted_iota(jnp.int32, s.shape, 0)
            col = ki * block_k + lax.broadcasted_iota(jnp.int32, s.shape, 1)
            s = jnp.where(col <= row, s, -jnp.inf)

        m_prev = m_sc[...]
        m_new = jnp.maximum(m_prev, jnp.max(s, axis=-1, keepdims=True))
        alpha = jnp.exp(m_prev - m_new)                      # f32 (no bf16 EUP on v5e)
        p = jnp.exp(s - m_new)                               # unnormalized probs, f32
        l_sc[...] = alpha * l_sc[...] + jnp.sum(p, axis=-1, keepdims=True)
        v = v_ref[...].astype(jnp.bfloat16)
        acc_sc[...] = alpha * acc_sc[...] + jnp.dot(
            p.astype(jnp.bfloat16), v, preferred_element_type=jnp.float32)
        m_sc[...] = m_new

    # Mask only needed when the kv block crosses the diagonal.
    crosses_diag = (ki * block_k + (block_k - 1)) > (qi * block_q)

    @pl.when(jnp.logical_not(crosses_diag))
    def _():
        online_softmax_update(apply_causal_mask=False)

    @pl.when(crosses_diag)
    def _():
        online_softmax_update(apply_causal_mask=True)

    # Finalize on the last kv block of this q tile (the diagonal block); the
    # output block index is constant across the remaining-steps-free schedule,
    # so the value stays resident until the q-tile boundary write-back.
    @pl.when((ki + 1) * block_k >= (qi + 1) * block_q)
    def _():
        # Deferred normalization: one (TQ, dh) multiply by an EUP reciprocal
        # instead of dividing the full (TQ, TK) attention matrix.
        inv_l = pl.reciprocal(l_sc[...], approx=True)
        o_ref[...] = (acc_sc[...] * inv_l).astype(o_ref.dtype)


def _flash_attention(q, k, v, n_heads, *, block_q=128, block_k=256):
    """q, k, v: (B, N, D) with D = n_heads * dh; q pre-scaled by 1/sqrt(dh)."""
    B, N, D = q.shape
    H = n_heads
    dh = D // H
    tq = _pick_tile(N, block_q, 8)
    tk = _pick_tile(N, block_k, 8)
    nq = N // tq

    # Lower-triangular (qi, ki) schedule flattened into one grid axis; the
    # (qi, ki) pairs are scalar-prefetched into SMEM and drive the index_maps.
    qi_list, ki_list = [], []
    for qi in range(nq):
        last_ki = (qi * tq + tq - 1) // tk       # kv block containing the diagonal
        for ki in range(last_ki + 1):
            qi_list.append(qi)
            ki_list.append(ki)
    qi_map = jnp.asarray(qi_list, dtype=jnp.int32)
    ki_map = jnp.asarray(ki_list, dtype=jnp.int32)
    n_steps = len(qi_list)

    kernel = functools.partial(_flash_attn_kernel, block_q=tq, block_k=tk)
    scratch = [
        pltpu.VMEM((tq, 1), jnp.float32),     # running row max m
        pltpu.VMEM((tq, 1), jnp.float32),     # running row sum l
        pltpu.VMEM((tq, dh), jnp.float32),    # unnormalized output accumulator
    ]
    params = pltpu.CompilerParams(
        dimension_semantics=("parallel", "parallel", "arbitrary"))

    direct = (dh % 128 == 0) or (H == 1)
    if direct:
        # Heads indexed straight out of / into the (B, N, D) layout: no wrapper
        # split/merge transposes (each is a full-tensor HBM round trip) and the
        # output store is lane-dense.
        q_spec = pl.BlockSpec((None, tq, dh), lambda b, h, s, qm, km: (b, qm[s], h))
        k_spec = pl.BlockSpec((None, tk, dh), lambda b, h, s, qm, km: (b, km[s], h))
        o_spec = pl.BlockSpec((None, tq, dh), lambda b, h, s, qm, km: (b, qm[s], h))
        return pl.pallas_call(
            kernel,
            out_shape=jax.ShapeDtypeStruct((B, N, D), q.dtype),
            grid_spec=pltpu.PrefetchScalarGridSpec(
                num_scalar_prefetch=2,
                grid=(B, H, n_steps),
                in_specs=[q_spec, k_spec, k_spec],
                out_specs=o_spec,
                scratch_shapes=scratch,
            ),
            compiler_params=params,
        )(qi_map, ki_map, q, k, v)

    # dh not a multiple of the 128-lane width: fall back to a head-split
    # (B, H, N, dh) layout so block last dims equal the full array dim.
    # TODO(synk): for dh < 128 the (tq, dh) output blocks use partial (masked)
    # lane stores; a packed multi-head output layout would avoid that.
    def split_heads(t):
        return jnp.transpose(t.reshape(B, N, H, dh), (0, 2, 1, 3))

    q4, k4, v4 = split_heads(q), split_heads(k), split_heads(v)
    q_spec = pl.BlockSpec((None, None, tq, dh), lambda b, h, s, qm, km: (b, h, qm[s], 0))
    k_spec = pl.BlockSpec((None, None, tk, dh), lambda b, h, s, qm, km: (b, h, km[s], 0))
    o_spec = pl.BlockSpec((None, None, tq, dh), lambda b, h, s, qm, km: (b, h, qm[s], 0))
    out = pl.pallas_call(
        kernel,
        out_shape=jax.ShapeDtypeStruct((B, H, N, dh), q.dtype),
        grid_spec=pltpu.PrefetchScalarGridSpec(
            num_scalar_prefetch=2,
            grid=(B, H, n_steps),
            in_specs=[q_spec, k_spec, k_spec],
            out_specs=o_spec,
            scratch_shapes=scratch,
        ),
        compiler_params=params,
    )(qi_map, ki_map, q4, k4, v4)
    return jnp.transpose(out, (0, 2, 1, 3)).reshape(B, N, D)


# ---------------------------------------------------------------------------
# Kernel 3: generic linear (used for the fused output projection), with the
# same row/Dout tiling as the QKV projection.
# ---------------------------------------------------------------------------
def _linear_kernel(x_ref, w_ref, b_ref, o_ref):
    x = x_ref[...].astype(jnp.bfloat16)
    acc = jnp.dot(x, w_ref[...], preferred_element_type=jnp.float32)
    o_ref[...] = (acc + b_ref[...]).astype(o_ref.dtype)


def _linear(x, w, b, *, block_m=512, block_d=512, out_dtype=None):
    M, Din = x.shape
    Dout = w.shape[1]
    out_dtype = x.dtype if out_dtype is None else out_dtype
    tm = _pick_tile(M, block_m, 8)
    td = _pick_tile(Dout, block_d, 128)
    grid = (M // tm, Dout // td)
    return pl.pallas_call(
        _linear_kernel,
        out_shape=jax.ShapeDtypeStruct((M, Dout), out_dtype),
        grid_spec=pltpu.PrefetchScalarGridSpec(
            num_scalar_prefetch=0,
            grid=grid,
            in_specs=[
                pl.BlockSpec((tm, Din), lambda i, j: (i, 0)),
                pl.BlockSpec((Din, td), lambda i, j: (0, j)),
                pl.BlockSpec((1, td), lambda i, j: (0, j)),
            ],
            out_specs=pl.BlockSpec((tm, td), lambda i, j: (i, j)),
        ),
        compiler_params=pltpu.CompilerParams(
            dimension_semantics=("parallel", "parallel"),
            vmem_limit_bytes=32 * 1024 * 1024,
        ),
    )(x, w, b)


# ---------------------------------------------------------------------------
# Full module forward.
# ---------------------------------------------------------------------------
def causal_self_attention(x, wkqv, bkqv, wproj_t, bproj):
    """
    x:       (B, N, D)      float32
    wkqv:    (H, D, 3*dh)   per-head KQV weights, pre-transposed (y = x @ w + b),
                            columns ordered [k | q | v] to match torch chunk(3, -1)
    bkqv:    (H, 3*dh)      per-head KQV bias
    wproj_t: (D, D)         = proj.weight.T
    bproj:   (D,)           = proj.bias
    returns: (B, N, D)
    """
    B, N, D = x.shape
    H, _, three_dh = wkqv.shape
    dh = three_dh // 3
    assert H * dh == D
    scale = 1.0 / math.sqrt(dh)

    # Fuse per-head weights into head-concatenated (D, D) matrices (one big
    # D-contraction per projection instead of H small dh-wide ones).
    wk = jnp.transpose(wkqv[:, :, 0 * dh:1 * dh], (1, 0, 2)).reshape(D, D)
    wq = jnp.transpose(wkqv[:, :, 1 * dh:2 * dh], (1, 0, 2)).reshape(D, D)
    wv = jnp.transpose(wkqv[:, :, 2 * dh:3 * dh], (1, 0, 2)).reshape(D, D)
    bk = bkqv[:, 0 * dh:1 * dh].reshape(1, D)
    bq = bkqv[:, 1 * dh:2 * dh].reshape(1, D)
    bv = bkqv[:, 2 * dh:3 * dh].reshape(1, D)

    # Fold 1/sqrt(dh) into the q projection (removes the per-(TQ,TK) f32 scale
    # inside the flash kernel) and cast all weights to bf16 ONCE (halves weight
    # HBM traffic + VMEM residency and removes per-grid-step f32->bf16 casts).
    wq = (wq * scale).astype(jnp.bfloat16)
    bq = bq * scale
    wk = wk.astype(jnp.bfloat16)
    wv = wv.astype(jnp.bfloat16)
    wo = wproj_t.astype(jnp.bfloat16)

    # 1) fused KQV projection over the flattened (B*N, D) token axis.
    x2 = x.reshape(B * N, D)
    k2, q2, v2 = _qkv_projection(x2, wk, wq, wv, bk, bq, bv)
    k_all = k2.reshape(B, N, D)
    q_all = q2.reshape(B, N, D)
    v_all = v2.reshape(B, N, D)

    # 2) flash-style causal attention per head (triangular kv schedule; heads
    #    indexed inside the kernel when dh is lane-aligned).
    ctx = _flash_attention(q_all, k_all, v_all, H)

    # 3) output projection: one (B*N, D) @ (D, D) matmul + bias.
    out = _linear(ctx.reshape(B * N, D), wo, bproj.reshape(1, D),
                  out_dtype=x.dtype)
    return out.reshape(B, N, D)


# ---------------------------------------------------------------------------
# Pure-JAX reference mirroring the PyTorch module semantics (f32).
# ---------------------------------------------------------------------------
def reference_jax(x, wkqv, bkqv, wproj_t, bproj):
    B, N, D = x.shape
    H, _, three_dh = wkqv.shape
    dh = three_dh // 3
    heads = []
    for h in range(H):
        out = x @ wkqv[h] + bkqv[h]                       # (B, N, 3*dh)
        k, q, v = out[..., :dh], out[..., dh:2 * dh], out[..., 2 * dh:]
        A = jnp.einsum("bnd,bmd->bnm", q, k) / math.sqrt(dh)
        mask = jnp.tril(jnp.ones((N, N)))
        A = jnp.where(mask == 0, -jnp.inf, A)
        A = jax.nn.softmax(A, axis=-1)
        heads.append(jnp.einsum("bnm,bmd->bnd", A, v))
    sa = jnp.concatenate(heads, axis=-1)                  # (B, N, D)
    return sa @ wproj_t + bproj.reshape(1, 1, D)


if __name__ == "__main__":
    def run_case(B, N, embed_dim, n_heads, tol):
        dh = embed_dim // n_heads
        key = jax.random.PRNGKey(0)
        k_x, k_w, k_b, k_pw, k_pb = jax.random.split(key, 5)

        x = jax.random.normal(k_x, (B, N, embed_dim), dtype=jnp.float32)
        # Per-head nn.Linear(embed_dim, 3*dh), stored pre-transposed (y = x@W + b).
        wkqv = (jax.random.normal(k_w, (n_heads, embed_dim, 3 * dh),
                                  dtype=jnp.float32) / math.sqrt(embed_dim))
        bkqv = jax.random.normal(k_b, (n_heads, 3 * dh), dtype=jnp.float32) * 0.02
        # nn.Linear(embed_dim, embed_dim): W^T and bias.
        wproj_t = (jax.random.normal(k_pw, (embed_dim, embed_dim),
                                     dtype=jnp.float32) / math.sqrt(embed_dim))
        bproj = jax.random.normal(k_pb, (embed_dim,), dtype=jnp.float32) * 0.02

        out = jax.jit(causal_self_attention)(x, wkqv, bkqv, wproj_t, bproj)
        out = jax.block_until_ready(out)
        ref = reference_jax(x, wkqv, bkqv, wproj_t, bproj)
        assert out.shape == (B, N, embed_dim)
        max_err = float(jnp.max(jnp.abs(out - ref)))
        # bf16 MXU operands (f32 accumulation) + approx reciprocal -> loose tol.
        assert jnp.allclose(out, ref, atol=tol, rtol=tol), \
            f"mismatch vs JAX reference, max abs err {max_err}"

    # Small module-consistent shapes (head-split path, single kv block).
    run_case(B=2, N=8, embed_dim=32, n_heads=4, tol=5e-2)
    # Multi-tile case: exercises the triangular (qi, ki) schedule (masked
    # diagonal + unmasked interior blocks, multi-step accumulation) and the
    # direct (B, N, D) head-indexing path (dh = 128).
    run_case(B=1, N=512, embed_dim=256, n_heads=2, tol=1e-1)

    print("KERNEL_OK")
</pallas_src>

<mosaic_0001>
module attributes {stable_mosaic.version = 11 : i64} {
  func.func @_qkv_proj_kernel(%arg0: i32, %arg1: i32, %arg2: memref<16x32xf32, #tpu.memory_space<vmem>>, %arg3: memref<32x32xbf16, #tpu.memory_space<vmem>>, %arg4: memref<32x32xbf16, #tpu.memory_space<vmem>>, %arg5: memref<32x32xbf16, #tpu.memory_space<vmem>>, %arg6: memref<1x32xf32, #tpu.memory_space<vmem>>, %arg7: memref<1x32xf32, #tpu.memory_space<vmem>>, %arg8: memref<1x32xf32, #tpu.memory_space<vmem>>, %arg9: memref<16x32xbf16, #tpu.memory_space<vmem>>, %arg10: memref<16x32xbf16, #tpu.memory_space<vmem>>, %arg11: memref<16x32xbf16, #tpu.memory_space<vmem>>) attributes {dimension_semantics = [#tpu.dimension_semantics<parallel>, #tpu.dimension_semantics<parallel>], iteration_bounds = array<i64: 1, 1>, scalar_prefetch = 0 : i64, scratch_operands = 0 : i64, tpu.core_type = #tpu.core_type<tc>, window_params = [{transform_indices = @transform_0, window_bounds = array<i64: 16, 32>}, {transform_indices = @transform_1, window_bounds = array<i64: 32, 32>}, {transform_indices = @transform_2, window_bounds = array<i64: 32, 32>}, {transform_indices = @transform_3, window_bounds = array<i64: 32, 32>}, {transform_indices = @transform_4, window_bounds = array<i64: 1, 32>}, {transform_indices = @transform_5, window_bounds = array<i64: 1, 32>}, {transform_indices = @transform_6, window_bounds = array<i64: 1, 32>}, {transform_indices = @transform_7, window_bounds = array<i64: 16, 32>}, {transform_indices = @transform_8, window_bounds = array<i64: 16, 32>}, {transform_indices = @transform_9, window_bounds = array<i64: 16, 32>}]} {
    %c0 = arith.constant 0 : index
    %c0_0 = arith.constant 0 : index
    %0 = vector.load %arg2[%c0, %c0_0] : memref<16x32xf32, #tpu.memory_space<vmem>>, vector<16x32xf32>
    %1 = arith.truncf %0 : vector<16x32xf32> to vector<16x32xbf16>
    %c0_1 = arith.constant 0 : index
    %c0_2 = arith.constant 0 : index
    %2 = vector.load %arg3[%c0_1, %c0_2] : memref<32x32xbf16, #tpu.memory_space<vmem>>, vector<32x32xbf16>
    %cst = arith.constant dense<0.000000e+00> : vector<16x32xf32>
    %3 = tpu.matmul %1, %2, %cst {dimension_numbers = #tpu.dot_dimension_numbers<[1], [0], [0], [1], [0, 0, 1, 1], [], []>} : vector<16x32xbf16>, vector<32x32xbf16>, vector<16x32xf32> -> vector<16x32xf32>
    %c0_3 = arith.constant 0 : index
    %c0_4 = arith.constant 0 : index
    %4 = vector.load %arg6[%c0_3, %c0_4] : memref<1x32xf32, #tpu.memory_space<vmem>>, vector<1x32xf32>
    %5 = vector.broadcast %4 : vector<1x32xf32> to vector<16x32xf32>
    %6 = arith.addf %3, %5 : vector<16x32xf32>
    %7 = arith.truncf %6 : vector<16x32xf32> to vector<16x32xbf16>
    %c0_5 = arith.constant 0 : index
    %c0_6 = arith.constant 0 : index
    %8 = vector.load %arg9[%c0_5, %c0_6] : memref<16x32xbf16, #tpu.memory_space<vmem>>, vector<16x32xbf16>
    tpu.vector_store %arg9[%c0_5, %c0_6], %7 {strides = array<i32>} : memref<16x32xbf16, #tpu.memory_space<vmem>>, vector<16x32xbf16>,
    %c0_7 = arith.constant 0 : index
    %c0_8 = arith.constant 0 : index
    %9 = vector.load %arg4[%c0_7, %c0_8] : memref<32x32xbf16, #tpu.memory_space<vmem>>, vector<32x32xbf16>
    %cst_9 = arith.constant dense<0.000000e+00> : vector<16x32xf32>
    %10 = tpu.matmul %1, %9, %cst_9 {dimension_numbers = #tpu.dot_dimension_numbers<[1], [0], [0], [1], [0, 0, 1, 1], [], []>} : vector<16x32xbf16>, vector<32x32xbf16>, vector<16x32xf32> -> vector<16x32xf32>
    %c0_10 = arith.constant 0 : index
    %c0_11 = arith.constant 0 : index
    %11 = vector.load %arg7[%c0_10, %c0_11] : memref<1x32xf32, #tpu.memory_space<vmem>>, vector<1x32xf32>
    %12 = vector.broadcast %11 : vector<1x32xf32> to vector<16x32xf32>
    %13 = arith.addf %10, %12 : vector<16x32xf32>
    %14 = arith.truncf %13 : vector<16x32xf32> to vector<16x32xbf16>
    %c0_12 = arith.constant 0 : index
    %c0_13 = arith.constant 0 : index
    %15 = vector.load %arg10[%c0_12, %c0_13] : memref<16x32xbf16, #tpu.memory_space<vmem>>, vector<16x32xbf16>
    tpu.vector_store %arg10[%c0_12, %c0_13], %14 {strides = array<i32>} : memref<16x32xbf16, #tpu.memory_space<vmem>>, vector<16x32xbf16>,
    %c0_14 = arith.constant 0 : index
    %c0_15 = arith.constant 0 : index
    %16 = vector.load %arg5[%c0_14, %c0_15] : memref<32x32xbf16, #tpu.memory_space<vmem>>, vector<32x32xbf16>
    %cst_16 = arith.constant dense<0.000000e+00> : vector<16x32xf32>
    %17 = tpu.matmul %1, %16, %cst_16 {dimension_numbers = #tpu.dot_dimension_numbers<[1], [0], [0], [1], [0, 0, 1, 1], [], []>} : vector<16x32xbf16>, vector<32x32xbf16>, vector<16x32xf32> -> vector<16x32xf32>
    %c0_17 = arith.constant 0 : index
    %c0_18 = arith.constant 0 : index
    %18 = vector.load %arg8[%c0_17, %c0_18] : memref<1x32xf32, #tpu.memory_space<vmem>>, vector<1x32xf32>
    %19 = vector.broadcast %18 : vector<1x32xf32> to vector<16x32xf32>
    %20 = arith.addf %17, %19 : vector<16x32xf32>
    %21 = arith.truncf %20 : vector<16x32xf32> to vector<16x32xbf16>
    %c0_19 = arith.constant 0 : index
    %c0_20 = arith.constant 0 : index
    %22 = vector.load %arg11[%c0_19, %c0_20] : memref<16x32xbf16, #tpu.memory_space<vmem>>, vector<16x32xbf16>
    tpu.vector_store %arg11[%c0_19, %c0_20], %21 {strides = array<i32>} : memref<16x32xbf16, #tpu.memory_space<vmem>>, vector<16x32xbf16>,
    return
  }
  func.func @transform_0(%arg0: i32, %arg1: i32) -> (i32, i32) {
    %c0_i32 = arith.constant 0 : i32
    %c0_i32_0 = arith.constant 0 : i32
    return %arg0, %c0_i32 : i32, i32
  }
  func.func @transform_1(%arg0: i32, %arg1: i32) -> (i32, i32) {
    %c0_i32 = arith.constant 0 : i32
    %c0_i32_0 = arith.constant 0 : i32
    return %c0_i32, %arg1 : i32, i32
  }
  func.func @transform_2(%arg0: i32, %arg1: i32) -> (i32, i32) {
    %c0_i32 = arith.constant 0 : i32
    %c0_i32_0 = arith.constant 0 : i32
    return %c0_i32, %arg1 : i32, i32
  }
  func.func @transform_3(%arg0: i32, %arg1: i32) -> (i32, i32) {
    %c0_i32 = arith.constant 0 : i32
    %c0_i32_0 = arith.constant 0 : i32
    return %c0_i32, %arg1 : i32, i32
  }
  func.func @transform_4(%arg0: i32, %arg1: i32) -> (i32, i32) {
    %c0_i32 = arith.constant 0 : i32
    %c0_i32_0 = arith.constant 0 : i32
    return %c0_i32, %arg1 : i32, i32
  }
  func.func @transform_5(%arg0: i32, %arg1: i32) -> (i32, i32) {
    %c0_i32 = arith.constant 0 : i32
    %c0_i32_0 = arith.constant 0 : i32
    return %c0_i32, %arg1 : i32, i32
  }
  func.func @transform_6(%arg0: i32, %arg1: i32) -> (i32, i32) {
    %c0_i32 = arith.constant 0 : i32
    %c0_i32_0 = arith.constant 0 : i32
    return %c0_i32, %arg1 : i32, i32
  }
  func.func @transform_7(%arg0: i32, %arg1: i32) -> (i32, i32) {
    %c0_i32 = arith.constant 0 : i32
    return %arg0, %arg1 : i32, i32
  }
  func.func @transform_8(%arg0: i32, %arg1: i32) -> (i32, i32) {
    %c0_i32 = arith.constant 0 : i32
    return %arg0, %arg1 : i32, i32
  }
  func.func @transform_9(%arg0: i32, %arg1: i32) -> (i32, i32) {
    %c0_i32 = arith.constant 0 : i32
    return %arg0, %arg1 : i32, i32
  }
}

module attributes {stable_mosaic.version = 11 : i64} {
  func.func @_flash_attn_kernel(%arg0: i32, %arg1: i32, %arg2: i32, %arg3: memref<1xi32, #tpu.memory_space<smem>>, %arg4: memref<1xi32, #tpu.memory_space<smem>>, %arg5: memref<1x1x8x8xbf16, #tpu.memory_space<vmem>>, %arg6: memref<1x1x8x8xbf16, #tpu.memory_space<vmem>>, %arg7: memref<1x1x8x8xbf16, #tpu.memory_space<vmem>>, %arg8: memref<1x1x8x8xbf16, #tpu.memory_space<vmem>>, %arg9: memref<8x1xf32, #tpu.memory_space<vmem>>, %arg10: memref<8x1xf32, #tpu.memory_space<vmem>>, %arg11: memref<8x8xf32, #tpu.memory_space<vmem>>) attributes {dimension_semantics = [#tpu.dimension_semantics<parallel>, #tpu.dimension_semantics<parallel>, #tpu.dimension_semantics<arbitrary>], iteration_bounds = array<i64: 2, 4, 1>, scalar_prefetch = 2 : i64, scratch_operands = 3 : i64, tpu.core_type = #tpu.core_type<tc>, window_params = [{transform_indices = @transform_0, window_bounds = array<i64: 1, 1, 8, 8>}, {transform_indices = @transform_1, window_bounds = array<i64: 1, 1, 8, 8>}, {transform_indices = @transform_2, window_bounds = array<i64: 1, 1, 8, 8>}, {transform_indices = @transform_3, window_bounds = array<i64: 1, 1, 8, 8>}]} {
    %0 = arith.index_cast %arg2 : i32 to index
    %1 = memref.load %arg3[%0] : memref<1xi32, #tpu.memory_space<smem>>
    %2 = arith.index_cast %arg2 : i32 to index
    %3 = memref.load %arg4[%2] : memref<1xi32, #tpu.memory_space<smem>>
    %c0_i32 = arith.constant 0 : i32
    %4 = arith.cmpi eq, %3, %c0_i32 : i32
    %5 = arith.extui %4 : i1 to i32
    %c0_i32_0 = arith.constant 0 : i32
    %6 = arith.cmpi ne, %5, %c0_i32_0 : i32
    scf.if %6 {
      %cst = arith.constant 0xFF800000 : f32
      %23 = vector.broadcast %cst : f32 to vector<8x1xf32>
      %c0 = arith.constant 0 : index
      %c0_8 = arith.constant 0 : index
      %24 = vector.load %arg9[%c0, %c0_8] : memref<8x1xf32, #tpu.memory_space<vmem>>, vector<8x1xf32>
      tpu.vector_store %arg9[%c0, %c0_8], %23 {strides = array<i32>} : memref<8x1xf32, #tpu.memory_space<vmem>>, vector<8x1xf32>,
      %cst_9 = arith.constant 0.000000e+00 : f32
      %25 = vector.broadcast %cst_9 : f32 to vector<8x1xf32>
      %c0_10 = arith.constant 0 : index
      %c0_11 = arith.constant 0 : index
      %26 = vector.load %arg10[%c0_10, %c0_11] : memref<8x1xf32, #tpu.memory_space<vmem>>, vector<8x1xf32>
      tpu.vector_store %arg10[%c0_10, %c0_11], %25 {strides = array<i32>} : memref<8x1xf32, #tpu.memory_space<vmem>>, vector<8x1xf32>,
      %cst_12 = arith.constant 0.000000e+00 : f32
      %27 = vector.broadcast %cst_12 : f32 to vector<8x8xf32>
      %c0_13 = arith.constant 0 : index
      %c0_14 = arith.constant 0 : index
      %28 = vector.load %arg11[%c0_13, %c0_14] : memref<8x8xf32, #tpu.memory_space<vmem>>, vector<8x8xf32>
      tpu.vector_store %arg11[%c0_13, %c0_14], %27 {strides = array<i32>} : memref<8x8xf32, #tpu.memory_space<vmem>>, vector<8x8xf32>,
    } else {
    }
    %c8_i32 = arith.constant 8 : i32
    %7 = arith.muli %3, %c8_i32 : i32
    %c7_i32 = arith.constant 7 : i32
    %8 = arith.addi %7, %c7_i32 : i32
    %c8_i32_1 = arith.constant 8 : i32
    %9 = arith.muli %1, %c8_i32_1 : i32
    %10 = arith.cmpi sgt, %8, %9 : i32
    %true = arith.constant true
    %11 = arith.xori %10, %true : i1
    %12 = arith.extui %11 : i1 to i32
    %c0_i32_2 = arith.constant 0 : i32
    %13 = arith.cmpi ne, %12, %c0_i32_2 : i32
    scf.if %13 {
      %c0 = arith.constant 0 : index
      %c0_8 = arith.constant 0 : index
      %c0_9 = arith.constant 0 : index
      %c0_10 = arith.constant 0 : index
      %23 = vector.load %arg5[%c0, %c0_8, %c0_9, %c0_10] : memref<1x1x8x8xbf16, #tpu.memory_space<vmem>>, vector<1x1x8x8xbf16>
      %24 = vector.shape_cast %23 : vector<1x1x8x8xbf16> to vector<8x8xbf16>
      %c0_11 = arith.constant 0 : index
      %c0_12 = arith.constant 0 : index
      %c0_13 = arith.constant 0 : index
      %c0_14 = arith.constant 0 : index
      %25 = vector.load %arg6[%c0_11, %c0_12, %c0_13, %c0_14] : memref<1x1x8x8xbf16, #tpu.memory_space<vmem>>, vector<1x1x8x8xbf16>
      %26 = vector.shape_cast %25 : vector<1x1x8x8xbf16> to vector<8x8xbf16>
      %cst = arith.constant dense<0.000000e+00> : vector<8x8xf32>
      %27 = tpu.matmul %24, %26, %cst {dimension_numbers = #tpu.dot_dimension_numbers<[1], [1], [0], [0], [0, 0, 1, 0], [], []>} : vector<8x8xbf16>, vector<8x8xbf16>, vector<8x8xf32> -> vector<8x8xf32>
      %c0_15 = arith.constant 0 : index
      %c0_16 = arith.constant 0 : index
      %28 = vector.load %arg9[%c0_15, %c0_16] : memref<8x1xf32, #tpu.memory_space<vmem>>, vector<8x1xf32>
      %cst_17 = arith.constant dense<0xFF800000> : vector<8xf32>
      %29 = vector.multi_reduction <maximumf>, %27, %cst_17 [1] : vector<8x8xf32> to vector<8xf32>
      %30 = vector.shape_cast %29 : vector<8xf32> to vector<8x1xf32>
      %31 = arith.maximumf %28, %30 : vector<8x1xf32>
      %32 = arith.subf %28, %31 : vector<8x1xf32>
      %33 = math.exp %32 : vector<8x1xf32>
      %34 = vector.broadcast %31 : vector<8x1xf32> to vector<8x8xf32>
      %35 = arith.subf %27, %34 : vector<8x8xf32>
      %36 = math.exp %35 : vector<8x8xf32>
      %c0_18 = arith.constant 0 : index
      %c0_19 = arith.constant 0 : index
      %37 = vector.load %arg10[%c0_18, %c0_19] : memref<8x1xf32, #tpu.memory_space<vmem>>, vector<8x1xf32>
      %38 = arith.mulf %33, %37 : vector<8x1xf32>
      %cst_20 = arith.constant dense<0.000000e+00> : vector<8xf32>
      %39 = vector.multi_reduction <add>, %36, %cst_20 [1] : vector<8x8xf32> to vector<8xf32>
      %40 = vector.shape_cast %39 : vector<8xf32> to vector<8x1xf32>
      %41 = arith.addf %38, %40 : vector<8x1xf32>
      %c0_21 = arith.constant 0 : index
      %c0_22 = arith.constant 0 : index
      %42 = vector.load %arg10[%c0_21, %c0_22] : memref<8x1xf32, #tpu.memory_space<vmem>>, vector<8x1xf32>
      tpu.vector_store %arg10[%c0_21, %c0_22], %41 {strides = array<i32>} : memref<8x1xf32, #tpu.memory_space<vmem>>, vector<8x1xf32>,
      %c0_23 = arith.constant 0 : index
      %c0_24 = arith.constant 0 : index
      %c0_25 = arith.constant 0 : index
      %c0_26 = arith.constant 0 : index
      %43 = vector.load %arg7[%c0_23, %c0_24, %c0_25, %c0_26] : memref<1x1x8x8xbf16, #tpu.memory_space<vmem>>, vector<1x1x8x8xbf16>
      %44 = vector.shape_cast %43 : vector<1x1x8x8xbf16> to vector<8x8xbf16>
      %c0_27 = arith.constant 0 : index
      %c0_28 = arith.constant 0 : index
      %45 = vector.load %arg11[%c0_27, %c0_28] : memref<8x8xf32, #tpu.memory_space<vmem>>, vector<8x8xf32>
      %46 = vector.broadcast %33 : vector<8x1xf32> to vector<8x8xf32>
      %47 = arith.mulf %46, %45 : vector<8x8xf32>
      %48 = arith.truncf %36 : vector<8x8xf32> to vector<8x8xbf16>
      %cst_29 = arith.constant dense<0.000000e+00> : vector<8x8xf32>
      %49 = tpu.matmul %48, %44, %cst_29 {dimension_numbers = #tpu.dot_dimension_numbers<[1], [0], [0], [1], [0, 0, 1, 1], [], []>} : vector<8x8xbf16>, vector<8x8xbf16>, vector<8x8xf32> -> vector<8x8xf32>
      %50 = arith.addf %47, %49 : vector<8x8xf32>
      %c0_30 = arith.constant 0 : index
      %c0_31 = arith.constant 0 : index
      %51 = vector.load %arg11[%c0_30, %c0_31] : memref<8x8xf32, #tpu.memory_space<vmem>>, vector<8x8xf32>
      tpu.vector_store %arg11[%c0_30, %c0_31], %50 {strides = array<i32>} : memref<8x8xf32, #tpu.memory_space<vmem>>, vector<8x8xf32>,
      %c0_32 = arith.constant 0 : index
      %c0_33 = arith.constant 0 : index
      %52 = vector.load %arg9[%c0_32, %c0_33] : memref<8x1xf32, #tpu.memory_space<vmem>>, vector<8x1xf32>
      tpu.vector_store %arg9[%c0_32, %c0_33], %31 {strides = array<i32>} : memref<8x1xf32, #tpu.memory_space<vmem>>, vector<8x1xf32>,
    } else {
    }
    %14 = arith.extui %10 : i1 to i32
    %c0_i32_3 = arith.constant 0 : i32
    %15 = arith.cmpi ne, %14, %c0_i32_3 : i32
    scf.if %15 {
      %c0 = arith.constant 0 : index
      %c0_8 = arith.constant 0 : index
      %c0_9 = arith.constant 0 : index
      %c0_10 = arith.constant 0 : index
      %23 = vector.load %arg5[%c0, %c0_8, %c0_9, %c0_10] : memref<1x1x8x8xbf16, #tpu.memory_space<vmem>>, vector<1x1x8x8xbf16>
      %24 = vector.shape_cast %23 : vector<1x1x8x8xbf16> to vector<8x8xbf16>
      %c0_11 = arith.constant 0 : index
      %c0_12 = arith.constant 0 : index
      %c0_13 = arith.constant 0 : index
      %c0_14 = arith.constant 0 : index
      %25 = vector.load %arg6[%c0_11, %c0_12, %c0_13, %c0_14] : memref<1x1x8x8xbf16, #tpu.memory_space<vmem>>, vector<1x1x8x8xbf16>
      %26 = vector.shape_cast %25 : vector<1x1x8x8xbf16> to vector<8x8xbf16>
      %cst = arith.constant dense<0.000000e+00> : vector<8x8xf32>
      %27 = tpu.matmul %24, %26, %cst {dimension_numbers = #tpu.dot_dimension_numbers<[1], [1], [0], [0], [0, 0, 1, 0], [], []>} : vector<8x8xbf16>, vector<8x8xbf16>, vector<8x8xf32> -> vector<8x8xf32>
      %c8_i32_15 = arith.constant 8 : i32
      %28 = arith.muli %1, %c8_i32_15 : i32
      %29 = tpu.iota {dimensions = array<i32: 0>} : vector<8x8xi32>
      %30 = vector.broadcast %28 : i32 to vector<8x8xi32>
      %31 = arith.addi %30, %29 : vector<8x8xi32>
      %c8_i32_16 = arith.constant 8 : i32
      %32 = arith.muli %3, %c8_i32_16 : i32
      %33 = tpu.iota {dimensions = array<i32: 1>} : vector<8x8xi32>
      %34 = vector.broadcast %32 : i32 to vector<8x8xi32>
      %35 = arith.addi %34, %33 : vector<8x8xi32>
      %36 = arith.cmpi sle, %35, %31 : vector<8x8xi32>
      %cst_17 = arith.constant 0xFF800000 : f32
      %37 = vector.broadcast %cst_17 : f32 to vector<8x8xf32>
      %38 = arith.select %36, %27, %37 : vector<8x8xi1>, vector<8x8xf32>
      %c0_18 = arith.constant 0 : index
      %c0_19 = arith.constant 0 : index
      %39 = vector.load %arg9[%c0_18, %c0_19] : memref<8x1xf32, #tpu.memory_space<vmem>>, vector<8x1xf32>
      %cst_20 = arith.constant dense<0xFF800000> : vector<8xf32>
      %40 = vector.multi_reduction <maximumf>, %38, %cst_20 [1] : vector<8x8xf32> to vector<8xf32>
      %41 = vector.shape_cast %40 : vector<8xf32> to vector<8x1xf32>
      %42 = arith.maximumf %39, %41 : vector<8x1xf32>
      %43 = arith.subf %39, %42 : vector<8x1xf32>
      %44 = math.exp %43 : vector<8x1xf32>
      %45 = vector.broadcast %42 : vector<8x1xf32> to vector<8x8xf32>
      %46 = arith.subf %38, %45 : vector<8x8xf32>
      %47 = math.exp %46 : vector<8x8xf32>
      %c0_21 = arith.constant 0 : index
      %c0_22 = arith.constant 0 : index
      %48 = vector.load %arg10[%c0_21, %c0_22] : memref<8x1xf32, #tpu.memory_space<vmem>>, vector<8x1xf32>
      %49 = arith.mulf %44, %48 : vector<8x1xf32>
      %cst_23 = arith.constant dense<0.000000e+00> : vector<8xf32>
      %50 = vector.multi_reduction <add>, %47, %cst_23 [1] : vector<8x8xf32> to vector<8xf32>
      %51 = vector.shape_cast %50 : vector<8xf32> to vector<8x1xf32>
      %52 = arith.addf %49, %51 : vector<8x1xf32>
      %c0_24 = arith.constant 0 : index
      %c0_25 = arith.constant 0 : index
      %53 = vector.load %arg10[%c0_24, %c0_25] : memref<8x1xf32, #tpu.memory_space<vmem>>, vector<8x1xf32>
      tpu.vector_store %arg10[%c0_24, %c0_25], %52 {strides = array<i32>} : memref<8x1xf32, #tpu.memory_space<vmem>>, vector<8x1xf32>,
      %c0_26 = arith.constant 0 : index
      %c0_27 = arith.constant 0 : index
      %c0_28 = arith.constant 0 : index
      %c0_29 = arith.constant 0 : index
      %54 = vector.load %arg7[%c0_26, %c0_27, %c0_28, %c0_29] : memref<1x1x8x8xbf16, #tpu.memory_space<vmem>>, vector<1x1x8x8xbf16>
      %55 = vector.shape_cast %54 : vector<1x1x8x8xbf16> to vector<8x8xbf16>
      %c0_30 = arith.constant 0 : index
      %c0_31 = arith.constant 0 : index
      %56 = vector.load %arg11[%c0_30, %c0_31] : memref<8x8xf32, #tpu.memory_space<vmem>>, vector<8x8xf32>
      %57 = vector.broadcast %44 : vector<8x1xf32> to vector<8x8xf32>
      %58 = arith.mulf %57, %56 : vector<8x8xf32>
      %59 = arith.truncf %47 : vector<8x8xf32> to vector<8x8xbf16>
      %cst_32 = arith.constant dense<0.000000e+00> : vector<8x8xf32>
      %60 = tpu.matmul %59, %55, %cst_32 {dimension_numbers = #tpu.dot_dimension_numbers<[1], [0], [0], [1], [0, 0, 1, 1], [], []>} : vector<8x8xbf16>, vector<8x8xbf16>, vector<8x8xf32> -> vector<8x8xf32>
      %61 = arith.addf %58, %60 : vector<8x8xf32>
      %c0_33 = arith.constant 0 : index
      %c0_34 = arith.constant 0 : index
      %62 = vector.load %arg11[%c0_33, %c0_34] : memref<8x8xf32, #tpu.memory_space<vmem>>, vector<8x8xf32>
      tpu.vector_store %arg11[%c0_33, %c0_34], %61 {strides = array<i32>} : memref<8x8xf32, #tpu.memory_space<vmem>>, vector<8x8xf32>,
      %c0_35 = arith.constant 0 : index
      %c0_36 = arith.constant 0 : index
      %63 = vector.load %arg9[%c0_35, %c0_36] : memref<8x1xf32, #tpu.memory_space<vmem>>, vector<8x1xf32>
      tpu.vector_store %arg9[%c0_35, %c0_36], %42 {strides = array<i32>} : memref<8x1xf32, #tpu.memory_space<vmem>>, vector<8x1xf32>,
    } else {
    }
    %c1_i32 = arith.constant 1 : i32
    %16 = arith.addi %3, %c1_i32 : i32
    %c8_i32_4 = arith.constant 8 : i32
    %17 = arith.muli %16, %c8_i32_4 : i32
    %c1_i32_5 = arith.constant 1 : i32
    %18 = arith.addi %1, %c1_i32_5 : i32
    %c8_i32_6 = arith.constant 8 : i32
    %19 = arith.muli %18, %c8_i32_6 : i32
    %20 = arith.cmpi sge, %17, %19 : i32
    %21 = arith.extui %20 : i1 to i32
    %c0_i32_7 = arith.constant 0 : i32
    %22 = arith.cmpi ne, %21, %c0_i32_7 : i32
    scf.if %22 {
      %c0 = arith.constant 0 : index
      %c0_8 = arith.constant 0 : index
      %23 = vector.load %arg10[%c0, %c0_8] : memref<8x1xf32, #tpu.memory_space<vmem>>, vector<8x1xf32>
      %24 = tpu.reciprocal %23 {approx = true} : vector<8x1xf32> -> vector<8x1xf32>
      %c0_9 = arith.constant 0 : index
      %c0_10 = arith.constant 0 : index
      %25 = vector.load %arg11[%c0_9, %c0_10] : memref<8x8xf32, #tpu.memory_space<vmem>>, vector<8x8xf32>
      %26 = vector.broadcast %24 : vector<8x1xf32> to vector<8x8xf32>
      %27 = arith.mulf %25, %26 : vector<8x8xf32>
      %28 = arith.truncf %27 : vector<8x8xf32> to vector<8x8xbf16>
      %c0_11 = arith.constant 0 : index
      %c0_12 = arith.constant 0 : index
      %c0_13 = arith.constant 0 : index
      %c0_14 = arith.constant 0 : index
      %29 = vector.load %arg8[%c0_11, %c0_12, %c0_13, %c0_14] : memref<1x1x8x8xbf16, #tpu.memory_space<vmem>>, vector<1x1x8x8xbf16>
      %30 = vector.shape_cast %29 : vector<1x1x8x8xbf16> to vector<8x8xbf16>
      %31 = vector.shape_cast %28 : vector<8x8xbf16> to vector<1x1x8x8xbf16>
      tpu.vector_store %arg8[%c0_11, %c0_12, %c0_13, %c0_14], %31 {strides = array<i32>} : memref<1x1x8x8xbf16, #tpu.memory_space<vmem>>, vector<1x1x8x8xbf16>,
    } else {
    }
    return
  }
  func.func @transform_0(%arg0: i32, %arg1: i32, %arg2: i32, %arg3: memref<1xi32, #tpu.memory_space<smem>>, %arg4: memref<1xi32, #tpu.memory_space<smem>>) -> (i32, i32, i32, i32) {
    %0 = arith.index_cast %arg2 : i32 to index
    %1 = memref.load %arg3[%0] : memref<1xi32, #tpu.memory_space<smem>>
    %c0_i32 = arith.constant 0 : i32
    %c0_i32_0 = arith.constant 0 : i32
    return %arg0, %arg1, %1, %c0_i32 : i32, i32, i32, i32
  }
  func.func @transform_1(%arg0: i32, %arg1: i32, %arg2: i32, %arg3: memref<1xi32, #tpu.memory_space<smem>>, %arg4: memref<1xi32, #tpu.memory_space<smem>>) -> (i32, i32, i32, i32) {
    %0 = arith.index_cast %arg2 : i32 to index
    %1 = memref.load %arg4[%0] : memref<1xi32, #tpu.memory_space<smem>>
    %c0_i32 = arith.constant 0 : i32
    %c0_i32_0 = arith.constant 0 : i32
    return %arg0, %arg1, %1, %c0_i32 : i32, i32, i32, i32
  }
  func.func @transform_2(%arg0: i32, %arg1: i32, %arg2: i32, %arg3: memref<1xi32, #tpu.memory_space<smem>>, %arg4: memref<1xi32, #tpu.memory_space<smem>>) -> (i32, i32, i32, i32) {
    %0 = arith.index_cast %arg2 : i32 to index
    %1 = memref.load %arg4[%0] : memref<1xi32, #tpu.memory_space<smem>>
    %c0_i32 = arith.constant 0 : i32
    %c0_i32_0 = arith.constant 0 : i32
    return %arg0, %arg1, %1, %c0_i32 : i32, i32, i32, i32
  }
  func.func @transform_3(%arg0: i32, %arg1: i32, %arg2: i32, %arg3: memref<1xi32, #tpu.memory_space<smem>>, %arg4: memref<1xi32, #tpu.memory_space<smem>>) -> (i32, i32, i32, i32) {
    %0 = arith.index_cast %arg2 : i32 to index
    %1 = memref.load %arg3[%0] : memref<1xi32, #tpu.memory_space<smem>>
    %c0_i32 = arith.constant 0 : i32
    %c0_i32_0 = arith.constant 0 : i32
    return %arg0, %arg1, %1, %c0_i32 : i32, i32, i32, i32
  }
}

module attributes {stable_mosaic.version = 11 : i64} {
  func.func @_linear_kernel(%arg0: i32, %arg1: i32, %arg2: memref<16x32xbf16, #tpu.memory_space<vmem>>, %arg3: memref<32x32xbf16, #tpu.memory_space<vmem>>, %arg4: memref<1x32xf32, #tpu.memory_space<vmem>>, %arg5: memref<16x32xf32, #tpu.memory_space<vmem>>) attributes {dimension_semantics = [#tpu.dimension_semantics<parallel>, #tpu.dimension_semantics<parallel>], iteration_bounds = array<i64: 1, 1>, scalar_prefetch = 0 : i64, scratch_operands = 0 : i64, tpu.core_type = #tpu.core_type<tc>, window_params = [{transform_indices = @transform_0, window_bounds = array<i64: 16, 32>}, {transform_indices = @transform_1, window_bounds = array<i64: 32, 32>}, {transform_indices = @transform_2, window_bounds = array<i64: 1, 32>}, {transform_indices = @transform_3, window_bounds = array<i64: 16, 32>}]} {
    %c0 = arith.constant 0 : index
    %c0_0 = arith.constant 0 : index
    %0 = vector.load %arg2[%c0, %c0_0] : memref<16x32xbf16, #tpu.memory_space<vmem>>, vector<16x32xbf16>
    %c0_1 = arith.constant 0 : index
    %c0_2 = arith.constant 0 : index
    %1 = vector.load %arg3[%c0_1, %c0_2] : memref<32x32xbf16, #tpu.memory_space<vmem>>, vector<32x32xbf16>
    %cst = arith.constant dense<0.000000e+00> : vector<16x32xf32>
    %2 = tpu.matmul %0, %1, %cst {dimension_numbers = #tpu.dot_dimension_numbers<[1], [0], [0], [1], [0, 0, 1, 1], [], []>} : vector<16x32xbf16>, vector<32x32xbf16>, vector<16x32xf32> -> vector<16x32xf32>
    %c0_3 = arith.constant 0 : index
    %c0_4 = arith.constant 0 : index
    %3 = vector.load %arg4[%c0_3, %c0_4] : memref<1x32xf32, #tpu.memory_space<vmem>>, vector<1x32xf32>
    %4 = vector.broadcast %3 : vector<1x32xf32> to vector<16x32xf32>
    %5 = arith.addf %2, %4 : vector<16x32xf32>
    %c0_5 = arith.constant 0 : index
    %c0_6 = arith.constant 0 : index
    %6 = vector.load %arg5[%c0_5, %c0_6] : memref<16x32xf32, #tpu.memory_space<vmem>>, vector<16x32xf32>
    tpu.vector_store %arg5[%c0_5, %c0_6], %5 {strides = array<i32>} : memref<16x32xf32, #tpu.memory_space<vmem>>, vector<16x32xf32>,
    return
  }
  func.func @transform_0(%arg0: i32, %arg1: i32) -> (i32, i32) {
    %c0_i32 = arith.constant 0 : i32
    %c0_i32_0 = arith.constant 0 : i32
    return %arg0, %c0_i32 : i32, i32
  }
  func.func @transform_1(%arg0: i32, %arg1: i32) -> (i32, i32) {
    %c0_i32 = arith.constant 0 : i32
    %c0_i32_0 = arith.constant 0 : i32
    return %c0_i32, %arg1 : i32, i32
  }
  func.func @transform_2(%arg0: i32, %arg1: i32) -> (i32, i32) {
    %c0_i32 = arith.constant 0 : i32
    %c0_i32_0 = arith.constant 0 : i32
    return %c0_i32, %arg1 : i32, i32
  }
  func.func @transform_3(%arg0: i32, %arg1: i32) -> (i32, i32) {
    %c0_i32 = arith.constant 0 : i32
    return %arg0, %arg1 : i32, i32
  }
}

</mosaic_0001>

<llo_original>
// kernel: causal_self_attention.5
$region0: #{causal_self_attention.5}
  #allocation0 [shape = 'u32[]', space=smem, size = 0x4, offset = 0x4, fixed_abs, tag = 'smem constant byte address 0x4 - core index']
  #allocation1 [shape = 'u32[72,128]{1,0:T(1,128)}', space=vmem, size = 0x9000, scoped, tag = 'internal scratch']
  %s0 = inlined_call_operand.vmem [shape: bf16[16,32], index: 0, kind: input, shape index: {}]
  %s1 = inlined_call_operand.vmem [shape: bf16[32,32], index: 1, kind: input, shape index: {}]
  %s2 = inlined_call_operand.vmem [shape: f32[1,32], index: 2, kind: input, shape index: {}]
  %s3 = inlined_call_operand.hbm [shape: f32[16,32], index: 3, kind: output, shape index: {}]
  %s4 = sld [smem:[#allocation0]]
  $region22: #{causal_self_attention.5} parent=0
    _
  %s6 = ssub.s32 1, %s4
  %s7 = scalar_select 0, %s6, %s4
  $region1: #{causal_self_attention.5} parent=0
    #allocation2 [shape = 'u8[8192]{0}', space=vmem, size = 0x2000, scoped, tag = 'output window, operand 0, single buffered']
    #allocation3 [shape = 's32[1]{0}', space=sflag, size = 0x4, scoped, tag = 'scoped memory for causal_self_attention.5']
    %8 = vsyncpa [#allocation3], 0
    // Predicated region
    $region2: #{causal_self_attention.5} parent=1 // pred_check
      _
    $region3: #{causal_self_attention.5} parent=1 // pred_check_branch
      %10 = sbr.rel (0) target = $region5
    $region4: #{causal_self_attention.5} parent=1 // pred_region
      _
    $region5: #{causal_self_attention.5} parent=1 // pred_fallthru
      _
    // Predicated region
    $region6: #{causal_self_attention.5} parent=1 // pred_check
      _
    $region7: #{causal_self_attention.5} parent=1 // pred_check_branch
      %12 = sbr.rel (0) target = $region9
    $region8: #{causal_self_attention.5} parent=1 // pred_region
      _
    $region9: #{causal_self_attention.5} parent=1 // pred_fallthru
      _
    // Predicated region
    $region10: #{causal_self_attention.5} parent=1 // pred_check
      _
    $region11: #{causal_self_attention.5} parent=1 // pred_check_branch
      %14 = sbr.rel (0) target = $region13
    $region12: #{causal_self_attention.5} parent=1 // pred_region
      _
    $region13: #{causal_self_attention.5} parent=1 // pred_fallthru
      _
    %v16 = vld [vmem:[%s0] sm:$0xf]
    %v17 = vld [vmem:[%s0 + $0x4] sm:$0xf]
    %v18 = vld [vmem:[%s1] sm:$0xf]
    %v19 = vld [vmem:[%s1 + $0x4] sm:$0xf]
    %v20 = vld [vmem:[%s1 + $0x8] sm:$0xf]
    %v21 = vld [vmem:[%s1 + $0xc] sm:$0xf]
    %v22 = vld [vmem:[%s2] sm:$0x1]
    %v24 = vperm.slane %v22, 0
    %v28 = vunpack.c.l.b16 %v16
    %v29 = vunpack.c.l.b16 %v17
    %v30 = vpack.c.b16 %v29, %v28
    %v35 = vunpack.c.l.b16 %v18
    %v36 = vunpack.c.l.b16 %v19
    %v37 = vunpack.c.l.b16 %v20
    %v38 = vunpack.c.l.b16 %v21
    %v39 = vpack.c.b16 %v36, %v35
    %v40 = vpack.c.b16 %v38, %v37
    %vm43 = vcmask 261120
    %v45 = vsel %vm43, %v30, 0
    %47 = vmatpush.bf16.msra.mxu0 0
    %48 = vmatpush.bf16.msra.mxu0 0
    %49 = vmatpush.bf16.msra.mxu0 0
    %50 = vmatpush.bf16.msra.mxu0 0
    %51 = vmatpush.bf16.msra.mxu0 0
    %52 = vmatpush.bf16.msra.mxu0 0
    %53 = vmatpush.bf16.msra.mxu0 %v40
    %54 = vmatpush.bf16.msra.mxu0 %v39
    %55 = vmatmul.bf16.gmra.mxu0 %v45
    %v56 = vpop.f32.mrf.mxu0
    %v57 = vadd.f32 %v24, %v56
    %v58 = vpop.f32.mrf.mxu0
    %v59 = vadd.f32 %v24, %v58
    %60 = vdwg.mxu0
    %61 = vst.msk [vmem:[#allocation2] sm:$0xff] %vm43, %v57
    %62 = vst.msk [vmem:[#allocation2 + $0x8] sm:$0xff] %vm43, %v59
    // Predicated region
    $region14: #{causal_self_attention.5} parent=1 // pred_check
      _
    $region15: #{causal_self_attention.5} parent=1 // pred_check_branch
      %64 = sbr.rel (0) target = $region17
    $region16: #{causal_self_attention.5} parent=1 // pred_region
      %66 = vsyncadd [#allocation3], 0
      %s67 = sshll.u32 [#allocation2], 4
      %s68 = int_to_ptr.vmem [resolvable:$true] %s67
      %s69 = sshll.u32 %s3, 4
      %s70 = int_to_ptr.hbm [resolvable:$true] %s69
      %75 = dma.vmem_to_hbm [thread:$0]  %s68, 256, %s70, [#allocation3], 128, 128, 8
    $region17: #{causal_self_attention.5} parent=1 // pred_fallthru
      _
    // Predicated region
    $region18: #{causal_self_attention.5} parent=1 // pred_check
      _
    $region19: #{causal_self_attention.5} parent=1 // pred_check_branch
      %77 = sbr.rel (0) target = $region21
    $region20: #{causal_self_attention.5} parent=1 // pred_region
      %79 = dma.done [#allocation3], 256
    $region21: #{causal_self_attention.5} parent=1 // pred_fallthru
      _
    %80 = vsyncpa [#allocation3], 1

// kernel: causal_self_attention.3
$region0: #{causal_self_attention.3}
  #allocation0 [shape = 'u32[]', space=smem, size = 0x4, offset = 0x4, fixed_abs, tag = 'smem constant byte address 0x4 - core index']
  #allocation1 [shape = 'u32[72,128]{1,0:T(1,128)}', space=vmem, size = 0x9000, scoped, tag = 'internal scratch']
  %s0 = inlined_call_operand.vmem [shape: f32[16,32], index: 0, kind: input, shape index: {}]
  %s1 = inlined_call_operand.vmem [shape: bf16[32,32], index: 1, kind: input, shape index: {}]
  %s2 = inlined_call_operand.vmem [shape: bf16[32,32], index: 2, kind: input, shape index: {}]
  %s3 = inlined_call_operand.vmem [shape: bf16[32,32], index: 3, kind: input, shape index: {}]
  %s4 = inlined_call_operand.vmem [shape: f32[1,32], index: 4, kind: input, shape index: {}]
  %s5 = inlined_call_operand.vmem [shape: f32[1,32], index: 5, kind: input, shape index: {}]
  %s6 = inlined_call_operand.vmem [shape: f32[1,32], index: 6, kind: input, shape index: {}]
  %s7 = inlined_call_operand.vmem [shape: bf16[16,32], index: 7, kind: output, shape index: {0}]
  %s8 = inlined_call_operand.vmem [shape: bf16[16,32], index: 8, kind: output, shape index: {1}]
  %s9 = inlined_call_operand.vmem [shape: bf16[16,32], index: 9, kind: output, shape index: {2}]
  %10 = xla_tuple %s7, %s8, %s9
  %s11 = sld [smem:[#allocation0]]
  $region54: #{causal_self_attention.3} parent=0
    _
  %s13 = ssub.s32 1, %s11
  %s14 = scalar_select 0, %s13, %s11
  // Predicated region
  $region2: #{causal_self_attention.3} parent=0 // pred_check
    _
  $region3: #{causal_self_attention.3} parent=0 // pred_check_branch
    %16 = sbr.rel (0) target = $region5
  $region4: #{causal_self_attention.3} parent=0 // pred_region
    _
  $region5: #{causal_self_attention.3} parent=0 // pred_fallthru
    _
  // Predicated region
  $region6: #{causal_self_attention.3} parent=0 // pred_check
    _
  $region7: #{causal_self_attention.3} parent=0 // pred_check_branch
    %18 = sbr.rel (0) target = $region9
  $region8: #{causal_self_attention.3} parent=0 // pred_region
    _
  $region9: #{causal_self_attention.3} parent=0 // pred_fallthru
    _
  // Predicated region
  $region10: #{causal_self_attention.3} parent=0 // pred_check
    _
  $region11: #{causal_self_attention.3} parent=0 // pred_check_branch
    %20 = sbr.rel (0) target = $region13
  $region12: #{causal_self_attention.3} parent=0 // pred_region
    _
  $region13: #{causal_self_attention.3} parent=0 // pred_fallthru
    _
  // Predicated region
  $region14: #{causal_self_attention.3} parent=0 // pred_check
    _
  $region15: #{causal_self_attention.3} parent=0 // pred_check_branch
    %22 = sbr.rel (0) target = $region17
  $region16: #{causal_self_attention.3} parent=0 // pred_region
    _
  $region17: #{causal_self_attention.3} parent=0 // pred_fallthru
    _
  // Predicated region
  $region18: #{causal_self_attention.3} parent=0 // pred_check
    _
  $region19: #{causal_self_attention.3} parent=0 // pred_check_branch
    %24 = sbr.rel (0) target = $region21
  $region20: #{causal_self_attention.3} parent=0 // pred_region
    _
  $region21: #{causal_self_attention.3} parent=0 // pred_fallthru
    _
  // Predicated region
  $region22: #{causal_self_attention.3} parent=0 // pred_check
    _
  $region23: #{causal_self_attention.3} parent=0 // pred_check_branch
    %26 = sbr.rel (0) target = $region25
  $region24: #{causal_self_attention.3} parent=0 // pred_region
    _
  $region25: #{causal_self_attention.3} parent=0 // pred_fallthru
    _
  // Predicated region
  $region26: #{causal_self_attention.3} parent=0 // pred_check
    _
  $region27: #{causal_self_attention.3} parent=0 // pred_check_branch
    %28 = sbr.rel (0) target = $region29
  $region28: #{causal_self_attention.3} parent=0 // pred_region
    _
  $region29: #{causal_self_attention.3} parent=0 // pred_fallthru
    _
  %v30 = vld [vmem:[%s0] sm:$0xff]
  %v31 = vld [vmem:[%s0 + $0x8] sm:$0xff]
  %v32 = vpack.c.bf16 %v31, %v30
  %v33 = vld [vmem:[%s1] sm:$0xf]
  %v34 = vld [vmem:[%s1 + $0x4] sm:$0xf]
  %v35 = vld [vmem:[%s1 + $0x8] sm:$0xf]
  %v36 = vld [vmem:[%s1 + $0xc] sm:$0xf]
  %v37 = vld [vmem:[%s4] sm:$0x1]
  %v39 = vperm.slane %v37, 0
  %v45 = vunpack.c.l.b16 %v33
  %v46 = vunpack.c.l.b16 %v34
  %v47 = vunpack.c.l.b16 %v35
  %v48 = vunpack.c.l.b16 %v36
  %v49 = vpack.c.b16 %v46, %v45
  %v50 = vpack.c.b16 %v48, %v47
  %vm53 = vcmask 261120
  %v55 = vsel %vm53, %v32, 0
  %57 = vmatpush.bf16.msra.mxu0 0
  %58 = vmatpush.bf16.msra.mxu0 0
  %59 = vmatpush.bf16.msra.mxu0 0
  %60 = vmatpush.bf16.msra.mxu0 0
  %61 = vmatpush.bf16.msra.mxu0 0
  %62 = vmatpush.bf16.msra.mxu0 0
  %63 = vmatpush.bf16.msra.mxu0 %v50
  %64 = vmatpush.bf16.msra.mxu0 %v49
  %65 = vmatmul.bf16.gmra.mxu0 %v55
  %v66 = vpop.f32.mrf.mxu0
  %v67 = vadd.f32 %v39, %v66
  %v68 = vpop.f32.mrf.mxu0
  %v69 = vadd.f32 %v39, %v68
  %70 = vdwg.mxu0
  %v71 = vpack.c.bf16 %v67, %v67
  %v72 = vpack.c.bf16 %v69, %v69
  %vm73 = vcmask 257024
  %74 = vst.msk [vmem:[%s7] sm:$0xf] %vm73, %v71
  %75 = vst.msk [vmem:[%s7 + $0x4] sm:$0xf] %vm73, %v72
  %v76 = vld [vmem:[%s2] sm:$0xf]
  %v77 = vld [vmem:[%s2 + $0x4] sm:$0xf]
  %v78 = vld [vmem:[%s2 + $0x8] sm:$0xf]
  %v79 = vld [vmem:[%s2 + $0xc] sm:$0xf]
  %v80 = vld [vmem:[%s5] sm:$0x1]
  %v82 = vperm.slane %v80, 0
  %v88 = vunpack.c.l.b16 %v76
  %v89 = vunpack.c.l.b16 %v77
  %v90 = vunpack.c.l.b16 %v78
  %v91 = vunpack.c.l.b16 %v79
  %v92 = vpack.c.b16 %v89, %v88
  %v93 = vpack.c.b16 %v91, %v90
  %96 = vmatpush.bf16.msra.mxu0 0
  %97 = vmatpush.bf16.msra.mxu0 0
  %98 = vmatpush.bf16.msra.mxu0 0
  %99 = vmatpush.bf16.msra.mxu0 0
  %100 = vmatpush.bf16.msra.mxu0 0
  %101 = vmatpush.bf16.msra.mxu0 0
  %102 = vmatpush.bf16.msra.mxu0 %v93
  %103 = vmatpush.bf16.msra.mxu0 %v92
  %104 = vmatmul.bf16.gmra.mxu0 %v55
  %v105 = vpop.f32.mrf.mxu0
  %v106 = vadd.f32 %v82, %v105
  %v107 = vpop.f32.mrf.mxu0
  %v108 = vadd.f32 %v82, %v107
  %109 = vdwg.mxu0
  %v110 = vpack.c.bf16 %v106, %v106
  %v111 = vpack.c.bf16 %v108, %v108
  %112 = vst.msk [vmem:[%s8] sm:$0xf] %vm73, %v110
  %113 = vst.msk [vmem:[%s8 + $0x4] sm:$0xf] %vm73, %v111
  %v114 = vld [vmem:[%s3] sm:$0xf]
  %v115 = vld [vmem:[%s3 + $0x4] sm:$0xf]
  %v116 = vld [vmem:[%s3 + $0x8] sm:$0xf]
  %v117 = vld [vmem:[%s3 + $0xc] sm:$0xf]
  %v118 = vld [vmem:[%s6] sm:$0x1]
  %v120 = vperm.slane %v118, 0
  %v126 = vunpack.c.l.b16 %v114
  %v127 = vunpack.c.l.b16 %v115
  %v128 = vunpack.c.l.b16 %v116
  %v129 = vunpack.c.l.b16 %v117
  %v130 = vpack.c.b16 %v127, %v126
  %v131 = vpack.c.b16 %v129, %v128
  %134 = vmatpush.bf16.msra.mxu0 0
  %135 = vmatpush.bf16.msra.mxu0 0
  %136 = vmatpush.bf16.msra.mxu0 0
  %137 = vmatpush.bf16.msra.mxu0 0
  %138 = vmatpush.bf16.msra.mxu0 0
  %139 = vmatpush.bf16.msra.mxu0 0
  %140 = vmatpush.bf16.msra.mxu0 %v131
  %141 = vmatpush.bf16.msra.mxu0 %v130
  %142 = vmatmul.bf16.gmra.mxu0 %v55
  %v143 = vpop.f32.mrf.mxu0
  %v144 = vadd.f32 %v120, %v143
  %v145 = vpop.f32.mrf.mxu0
  %v146 = vadd.f32 %v120, %v145
  %147 = vdwg.mxu0
  %v148 = vpack.c.bf16 %v144, %v144
  %v149 = vpack.c.bf16 %v146, %v146
  %150 = vst.msk [vmem:[%s9] sm:$0xf] %vm73, %v148
  %151 = vst.msk [vmem:[%s9 + $0x4] sm:$0xf] %vm73, %v149
  // Predicated region
  $region30: #{causal_self_attention.3} parent=0 // pred_check
    _
  $region31: #{causal_self_attention.3} parent=0 // pred_check_branch
    %153 = sbr.rel (0) target = $region33
  $region32: #{causal_self_attention.3} parent=0 // pred_region
    _
  $region33: #{causal_self_attention.3} parent=0 // pred_fallthru
    _
  // Predicated region
  $region34: #{causal_self_attention.3} parent=0 // pred_check
    _
  $region35: #{causal_self_attention.3} parent=0 // pred_check_branch
    %155 = sbr.rel (0) target = $region37
  $region36: #{causal_self_attention.3} parent=0 // pred_region
    _
  $region37: #{causal_self_attention.3} parent=0 // pred_fallthru
    _
  // Predicated region
  $region38: #{causal_self_attention.3} parent=0 // pred_check
    _
  $region39: #{causal_self_attention.3} parent=0 // pred_check_branch
    %157 = sbr.rel (0) target = $region41
  $region40: #{causal_self_attention.3} parent=0 // pred_region
    _
  $region41: #{causal_self_attention.3} parent=0 // pred_fallthru
    _
  // Predicated region
  $region42: #{causal_self_attention.3} parent=0 // pred_check
    _
  $region43: #{causal_self_attention.3} parent=0 // pred_check_branch
    %159 = sbr.rel (0) target = $region45
  $region44: #{causal_self_attention.3} parent=0 // pred_region
    _
  $region45: #{causal_self_attention.3} parent=0 // pred_fallthru
    _
  // Predicated region
  $region46: #{causal_self_attention.3} parent=0 // pred_check
    _
  $region47: #{causal_self_attention.3} parent=0 // pred_check_branch
    %161 = sbr.rel (0) target = $region49
  $region48: #{causal_self_attention.3} parent=0 // pred_region
    _
  $region49: #{causal_self_attention.3} parent=0 // pred_fallthru
    _
  // Predicated region
  $region50: #{causal_self_attention.3} parent=0 // pred_check
    _
  $region51: #{causal_self_attention.3} parent=0 // pred_check_branch
    %163 = sbr.rel (0) target = $region53
  $region52: #{causal_self_attention.3} parent=0 // pred_region
    _
  $region53: #{causal_self_attention.3} parent=0 // pred_fallthru
    _

// kernel: causal_self_attention.4
$region0: #{causal_self_attention.4}
  #allocation0 [shape = 'u32[]', space=smem, size = 0x4, offset = 0x4, fixed_abs, tag = 'smem constant byte address 0x4 - core index']
  #allocation1 [shape = 'u32[72,128]{1,0:T(1,128)}', space=vmem, size = 0x9000, scoped, tag = 'internal scratch']
  #allocation2 [shape = 'f32[8,1]{1,0:T(8,128)}', space=vmem, size = 0x1000, scoped, tag = 'scratch operand']
  #allocation3 [shape = 'f32[8,1]{1,0:T(8,128)}', space=vmem, size = 0x1000, scoped, tag = 'scratch operand']
  #allocation4 [shape = 'f32[8,8]{1,0:T(8,128)}', space=vmem, size = 0x1000, scoped, tag = 'scratch operand']
  #allocation5 [shape = 's32[1]{0}', space=sflag, size = 0x4, scoped, tag = 'scoped memory for causal_self_attention.4']
  #allocation6 [shape = 's32[1]{0:T(128)S(6)}', space=smem, size = 0x200, scoped, tag = 'prefetched SMEM operand 0']
  #allocation7 [shape = 's32[1]{0:T(128)S(6)}', space=smem, size = 0x200, scoped, tag = 'prefetched SMEM operand 1']
  %s0 = inlined_call_operand.<no memory space> [shape: s32[1], index: 0, kind: input, shape index: {}, may-alias: {0,1}]
  %s1 = inlined_call_operand.<no memory space> [shape: s32[1], index: 1, kind: input, shape index: {}, may-alias: {0,1}]
  %s2 = inlined_call_operand.vmem [shape: bf16[2,4,8,8], index: 2, kind: input, shape index: {}]
  %s3 = inlined_call_operand.vmem [shape: bf16[2,4,8,8], index: 3, kind: input, shape index: {}]
  %s4 = inlined_call_operand.vmem [shape: bf16[2,4,8,8], index: 4, kind: input, shape index: {}]
  %s5 = inlined_call_operand.vmem [shape: bf16[2,4,8,8], index: 5, kind: output, shape index: {}]
  %s6 = sld [smem:[#allocation0]]
  $region61: #{causal_self_attention.4} parent=0
    _
  %s8 = ssub.s32 1, %s6
  %s9 = scalar_select 0, %s8, %s6
  %10 = sst [smem:[#allocation6]] %s0
  %11 = sst [smem:[#allocation7]] %s1
  loop: start=0, step=1, limit=10
  $region2: #{causal_self_attention.4} parent=0 // loop_pre_header
    _
  $region3: #{causal_self_attention.4} parent=0 // loop_header
    %s13 = sphi 0, %s17
    %p14 = scmp.ge.s32.totalorder %s13, 10
    %s20 = sphi 0, %s39
    %s21 = sphi 0, %s35
    %s22 = sphi 0, %s31
    %s23 = sphi 0, %s20
    %s24 = sphi 0, %s21
    %s25 = sphi 0, %s22
    %s26 = sphi 0, %s23
    %s27 = sphi 0, %s24
    %s28 = sphi 0, %s25
    %s48 = sphi 0, %s50
    %s51 = sphi 0, %s48
    %s52 = sphi 0, %s51
    %s68 = sphi 0, %s52
    %s80 = sphi 0, %s82
    %s83 = sphi 0, %s80
    %s84 = sphi 0, %s83
    %s100 = sphi 0, %s84
    %s112 = sphi 0, %s114
    %s115 = sphi 0, %s112
    %s116 = sphi 0, %s115
    %s132 = sphi 0, %s116
    %s144 = sphi 0, %s146
    %s147 = sphi 0, %s144
    %s148 = sphi 0, %s147
    %s164 = sphi 0, %s148
  $region4: #{causal_self_attention.4} parent=0 // loop_header_branch
    %16 = sbr.rel (%p14) target = $region8
  $region5: #{causal_self_attention.4} parent=0 // loop_body
    %s18 = ssub.s32 %s13, 1
    %s19 = ssub.s32 %s13, 2
    %s29 = sadd.s32 1, %s22
    %p30 = scmp.ge.s32.totalorder %s29, 1
    %s31 = scalar_select %p30, 0, %s29
    %s32 = sadd.s32 1, %s21
    %s33 = scalar_select %p30, %s32, %s21
    %p34 = scmp.ge.s32.totalorder %s33, 4
    %s35 = scalar_select %p34, 0, %s33
    %s36 = sadd.s32 1, %s20
    %s37 = scalar_select %p34, %s36, %s20
    %p38 = scmp.ge.s32.totalorder %s37, 2
    %s39 = scalar_select %p38, 0, %s37
    %s40 = sld [smem:[#allocation6 + %s22]]
    %s41 = sld [smem:[#allocation6 + %s31]]
    %s42 = ssub.s32 %s20, %s39
    %s43 = ssub.s32 %s21, %s35
    %s44 = sor.u32 %s42, %s43
    %s45 = ssub.s32 %s40, %s41
    %s46 = sor.u32 %s44, %s45
    %p47 = scmp.eq.s32.totalorder %s46, 0
    %s49 = sadd.s32 %s48, 1
    %s50 = scalar_select %p47, %s48, %s49
    %p53 = pneg %p47
    %p54 = scmp.eq.s32.totalorder %s13, 7
    %p55 = por %p53, %p54
    %p56 = scmp.ne.s32.totalorder %s48, %s51
    %p57 = scmp.eq.s32.totalorder %s13, 0
    %p58 = por %p56, %p57
    %p59 = scmp.ne.s32.totalorder %s48, %s51
    %p60 = scmp.eq.s32.totalorder %s18, 7
    %p61 = por %p59, %p60
    %p62 = scmp.ne.s32.totalorder %s51, %s52
    %p63 = scmp.eq.s32.totalorder %s18, 0
    %p64 = por %p62, %p63
    %p65 = scmp.ne.s32.totalorder %s51, %s52
    %p66 = scmp.eq.s32.totalorder %s19, 7
    %p67 = por %p65, %p66
    %p69 = scmp.ne.s32.totalorder %s52, %s68
    %p70 = scmp.eq.s32.totalorder %s19, 0
    %p71 = por %p69, %p70
    %s72 = sld [smem:[#allocation7 + %s22]]
    %s73 = sld [smem:[#allocation7 + %s31]]
    %s74 = ssub.s32 %s20, %s39
    %s75 = ssub.s32 %s21, %s35
    %s76 = sor.u32 %s74, %s75
    %s77 = ssub.s32 %s72, %s73
    %s78 = sor.u32 %s76, %s77
    %p79 = scmp.eq.s32.totalorder %s78, 0
    %s81 = sadd.s32 %s80, 1
    %s82 = scalar_select %p79, %s80, %s81
    %p85 = pneg %p79
    %p86 = scmp.eq.s32.totalorder %s13, 7
    %p87 = por %p85, %p86
    %p88 = scmp.ne.s32.totalorder %s80, %s83
    %p89 = scmp.eq.s32.totalorder %s13, 0
    %p90 = por %p88, %p89
    %p91 = scmp.ne.s32.totalorder %s80, %s83
    %p92 = scmp.eq.s32.totalorder %s18, 7
    %p93 = por %p91, %p92
    %p94 = scmp.ne.s32.totalorder %s83, %s84
    %p95 = scmp.eq.s32.totalorder %s18, 0
    %p96 = por %p94, %p95
    %p97 = scmp.ne.s32.totalorder %s83, %s84
    %p98 = scmp.eq.s32.totalorder %s19, 7
    %p99 = por %p97, %p98
    %p101 = scmp.ne.s32.totalorder %s84, %s100
    %p102 = scmp.eq.s32.totalorder %s19, 0
    %p103 = por %p101, %p102
    %s104 = sld [smem:[#allocation7 + %s22]]
    %s105 = sld [smem:[#allocation7 + %s31]]
    %s106 = ssub.s32 %s20, %s39
    %s107 = ssub.s32 %s21, %s35
    %s108 = sor.u32 %s106, %s107
    %s109 = ssub.s32 %s104, %s105
    %s110 = sor.u32 %s108, %s109
    %p111 = scmp.eq.s32.totalorder %s110, 0
    %s113 = sadd.s32 %s112, 1
    %s114 = scalar_select %p111, %s112, %s113
    %p117 = pneg %p111
    %p118 = scmp.eq.s32.totalorder %s13, 7
    %p119 = por %p117, %p118
    %p120 = scmp.ne.s32.totalorder %s112, %s115
    %p121 = scmp.eq.s32.totalorder %s13, 0
    %p122 = por %p120, %p121
    %p123 = scmp.ne.s32.totalorder %s112, %s115
    %p124 = scmp.eq.s32.totalorder %s18, 7
    %p125 = por %p123, %p124
    %p126 = scmp.ne.s32.totalorder %s115, %s116
    %p127 = scmp.eq.s32.totalorder %s18, 0
    %p128 = por %p126, %p127
    %p129 = scmp.ne.s32.totalorder %s115, %s116
    %p130 = scmp.eq.s32.totalorder %s19, 7
    %p131 = por %p129, %p130
    %p133 = scmp.ne.s32.totalorder %s116, %s132
    %p134 = scmp.eq.s32.totalorder %s19, 0
    %p135 = por %p133, %p134
    %s136 = sld [smem:[#allocation6 + %s22]]
    %s137 = sld [smem:[#allocation6 + %s31]]
    %s138 = ssub.s32 %s20, %s39
    %s139 = ssub.s32 %s21, %s35
    %s140 = sor.u32 %s138, %s139
    %s141 = ssub.s32 %s136, %s137
    %s142 = sor.u32 %s140, %s141
    %p143 = scmp.eq.s32.totalorder %s142, 0
    %s145 = sadd.s32 %s144, 1
    %s146 = scalar_select %p143, %s144, %s145
    %p149 = pneg %p143
    %p150 = scmp.eq.s32.totalorder %s13, 7
    %p151 = por %p149, %p150
    %p152 = scmp.ne.s32.totalorder %s144, %s147
    %p153 = scmp.eq.s32.totalorder %s13, 0
    %p154 = por %p152, %p153
    %p155 = scmp.ne.s32.totalorder %s144, %s147
    %p156 = scmp.eq.s32.totalorder %s18, 7
    %p157 = por %p155, %p156
    %p158 = scmp.ne.s32.totalorder %s147, %s148
    %p159 = scmp.eq.s32.totalorder %s18, 0
    %p160 = por %p158, %p159
    %p161 = scmp.ne.s32.totalorder %s147, %s148
    %p162 = scmp.eq.s32.totalorder %s19, 7
    %p163 = por %p161, %p162
    %p165 = scmp.ne.s32.totalorder %s148, %s164
    %p166 = scmp.eq.s32.totalorder %s19, 0
    %p167 = por %p165, %p166
    %p168 = scmp.le.s32.totalorder 1, %s13
    %p169 = scmp.lt.s32.totalorder %s13, 9
    %p170 = pnand %p168, %p169
    %p171 = pneg %p170
    // Predicated region
    $region9: #{causal_self_attention.4} parent=5 // pred_check
      _
    $region10: #{causal_self_attention.4} parent=5 // pred_check_branch
      %173 = sbr.rel (%p170) target = $region12
    $region11: #{causal_self_attention.4} parent=5 // pred_region
      %s174 = ssub.s32 %s13, 1
    $region12: #{causal_self_attention.4} parent=5 // pred_fallthru
      _
    %p175 = scmp.lt.s32.totalorder %s13, 8
    // Predicated region
    $region13: #{causal_self_attention.4} parent=5 // pred_check
      %p176 = pneg %p175
    $region14: #{causal_self_attention.4} parent=5 // pred_check_branch
      %178 = sbr.rel (%p176) target = $region16
    $region15: #{causal_self_attention.4} parent=5 // pred_region
      // Predicated region
      $region17: #{causal_self_attention.4} parent=15 // pred_check
        %p179 = pneg %p58
      $region18: #{causal_self_attention.4} parent=15 // pred_check_branch
        %181 = sbr.rel (%p179) target = $region20
      $region19: #{causal_self_attention.4} parent=15 // pred_region
        %s182 = sld [smem:[#allocation6 + %s22]]
        %p183 = scmp.lt.s32.totalorder %s20, 1
        %s184 = scalar_select %p183, %s20, 1
        %p185 = scmp.lt.s32.totalorder %s21, 3
        %s186 = scalar_select %p185, %s21, 3
        %p187 = scmp.lt.s32.totalorder %s182, 0
        %s188 = scalar_select %p187, %s182, 0
        %s189 = sadd.s32 %s188, %s186
        %s190 = smul.addr %s184, 4
        %s191 = sadd.s32 %s189, %s190
        %s192 = smul.addr %s191, 4
        %s193 = scalar_lea.vmem %s2, %s192
        %s194 = sld [smem:[#allocation6 + %s22]]
      $region20: #{causal_self_attention.4} parent=15 // pred_fallthru
        _
      // Predicated region
      $region21: #{causal_self_attention.4} parent=15 // pred_check
        %p195 = pneg %p90
      $region22: #{causal_self_attention.4} parent=15 // pred_check_branch
        %197 = sbr.rel (%p195) target = $region24
      $region23: #{causal_self_attention.4} parent=15 // pred_region
        %s198 = sld [smem:[#allocation7 + %s22]]
        %p199 = scmp.lt.s32.totalorder %s20, 1
        %s200 = scalar_select %p199, %s20, 1
        %p201 = scmp.lt.s32.totalorder %s21, 3
        %s202 = scalar_select %p201, %s21, 3
        %p203 = scmp.lt.s32.totalorder %s198, 0
        %s204 = scalar_select %p203, %s198, 0
        %s205 = sadd.s32 %s204, %s202
        %s206 = smul.addr %s200, 4
        %s207 = sadd.s32 %s205, %s206
        %s208 = smul.addr %s207, 4
        %s209 = scalar_lea.vmem %s3, %s208
        %s210 = sld [smem:[#allocation7 + %s22]]
      $region24: #{causal_self_attention.4} parent=15 // pred_fallthru
        _
      // Predicated region
      $region25: #{causal_self_attention.4} parent=15 // pred_check
        %p211 = pneg %p122
      $region26: #{causal_self_attention.4} parent=15 // pred_check_branch
        %213 = sbr.rel (%p211) target = $region28
      $region27: #{causal_self_attention.4} parent=15 // pred_region
        %s214 = sld [smem:[#allocation7 + %s22]]
        %p215 = scmp.lt.s32.totalorder %s20, 1
        %s216 = scalar_select %p215, %s20, 1
        %p217 = scmp.lt.s32.totalorder %s21, 3
        %s218 = scalar_select %p217, %s21, 3
        %p219 = scmp.lt.s32.totalorder %s214, 0
        %s220 = scalar_select %p219, %s214, 0
        %s221 = sadd.s32 %s220, %s218
        %s222 = smul.addr %s216, 4
        %s223 = sadd.s32 %s221, %s222
        %s224 = smul.addr %s223, 4
        %s225 = scalar_lea.vmem %s4, %s224
        %s226 = sld [smem:[#allocation7 + %s22]]
      $region28: #{causal_self_attention.4} parent=15 // pred_fallthru
        _
    $region16: #{causal_self_attention.4} parent=5 // pred_fallthru
      _
    %p227 = scmp.le.s32.totalorder 1, %s13
    %p228 = scmp.lt.s32.totalorder %s13, 9
    %p229 = pnand %p227, %p228
    %p230 = pneg %p229
    // Predicated region
    $region29: #{causal_self_attention.4} parent=5 // pred_check
      _
    $region30: #{causal_self_attention.4} parent=5 // pred_check_branch
      %232 = sbr.rel (%p229) target = $region32
    $region31: #{causal_self_attention.4} parent=5 // pred_region
      %s233 = ssub.s32 %s13, 1
      %s234 = sld [smem:[#allocation6 + %s25]]
      %p235 = scmp.lt.s32.totalorder %s23, 1
      %s236 = scalar_select %p235, %s23, 1
      %p237 = scmp.lt.s32.totalorder %s24, 3
      %s238 = scalar_select %p237, %s24, 3
      %p239 = scmp.lt.s32.totalorder %s234, 0
      %s240 = scalar_select %p239, %s234, 0
      %s241 = sadd.s32 %s240, %s238
      %s242 = smul.addr %s236, 4
      %s243 = sadd.s32 %s241, %s242
      %s244 = smul.addr %s243, 4
      %s245 = scalar_lea.vmem %s2, %s244
      %p246 = pneg %p64
      %p247 = pneg %p61
      %s248 = sld [smem:[#allocation7 + %s25]]
      %p249 = scmp.lt.s32.totalorder %s23, 1
      %s250 = scalar_select %p249, %s23, 1
      %p251 = scmp.lt.s32.totalorder %s24, 3
      %s252 = scalar_select %p251, %s24, 3
      %p253 = scmp.lt.s32.totalorder %s248, 0
      %s254 = scalar_select %p253, %s248, 0
      %s255 = sadd.s32 %s254, %s252
      %s256 = smul.addr %s250, 4
      %s257 = sadd.s32 %s255, %s256
      %s258 = smul.addr %s257, 4
      %s259 = scalar_lea.vmem %s3, %s258
      %p260 = pneg %p96
      %p261 = pneg %p93
      %s262 = sld [smem:[#allocation7 + %s25]]
      %p263 = scmp.lt.s32.totalorder %s23, 1
      %s264 = scalar_select %p263, %s23, 1
      %p265 = scmp.lt.s32.totalorder %s24, 3
      %s266 = scalar_select %p265, %s24, 3
      %p267 = scmp.lt.s32.totalorder %s262, 0
      %s268 = scalar_select %p267, %s262, 0
      %s269 = sadd.s32 %s268, %s266
      %s270 = smul.addr %s264, 4
      %s271 = sadd.s32 %s269, %s270
      %s272 = smul.addr %s271, 4
      %s273 = scalar_lea.vmem %s4, %s272
      %p274 = pneg %p128
      %p275 = pneg %p125
      %p276 = pneg %p160
      %p277 = pneg %p157
      %s278 = sld [smem:[#allocation6 + %s25]]
      %p279 = scmp.lt.s32.totalorder %s23, 1
      %s280 = scalar_select %p279, %s23, 1
      %p281 = scmp.lt.s32.totalorder %s24, 3
      %s282 = scalar_select %p281, %s24, 3
      %p283 = scmp.lt.s32.totalorder %s278, 0
      %s284 = scalar_select %p283, %s278, 0
      %s285 = sadd.s32 %s284, %s282
      %s286 = smul.addr %s280, 4
      %s287 = sadd.s32 %s285, %s286
      %s288 = smul.addr %s287, 4
      %s289 = scalar_lea.vmem %s5, %s288
      %s290 = sld [smem:[#allocation6 + %s25]]
      %p291 = scmp.lt.s32.totalorder %s23, 1
      %s292 = scalar_select %p291, %s23, 1
      %p293 = scmp.lt.s32.totalorder %s24, 3
      %s294 = scalar_select %p293, %s24, 3
      %p295 = scmp.lt.s32.totalorder %s290, 0
      %s296 = scalar_select %p295, %s290, 0
      %s297 = sadd.s32 %s296, %s294
      %s298 = smul.addr %s292, 4
      %s299 = sadd.s32 %s297, %s298
      %s300 = smul.addr %s299, 4
      %s301 = scalar_lea.vmem %s2, %s300
      %s302 = sld [smem:[#allocation6 + %s25]]
      %s303 = sld [smem:[#allocation7 + %s25]]
      %p304 = scmp.lt.s32.totalorder %s23, 1
      %s305 = scalar_select %p304, %s23, 1
      %p306 = scmp.lt.s32.totalorder %s24, 3
      %s307 = scalar_select %p306, %s24, 3
      %p308 = scmp.lt.s32.totalorder %s303, 0
      %s309 = scalar_select %p308, %s303, 0
      %s310 = sadd.s32 %s309, %s307
      %s311 = smul.addr %s305, 4
      %s312 = sadd.s32 %s310, %s311
      %s313 = smul.addr %s312, 4
      %s314 = scalar_lea.vmem %s3, %s313
      %s315 = sld [smem:[#allocation7 + %s25]]
      %s316 = sld [smem:[#allocation7 + %s25]]
      %p317 = scmp.lt.s32.totalorder %s23, 1
      %s318 = scalar_select %p317, %s23, 1
      %p319 = scmp.lt.s32.totalorder %s24, 3
      %s320 = scalar_select %p319, %s24, 3
      %p321 = scmp.lt.s32.totalorder %s316, 0
      %s322 = scalar_select %p321, %s316, 0
      %s323 = sadd.s32 %s322, %s320
      %s324 = smul.addr %s318, 4
      %s325 = sadd.s32 %s323, %s324
      %s326 = smul.addr %s325, 4
      %s327 = scalar_lea.vmem %s4, %s326
      %s328 = sld [smem:[#allocation7 + %s25]]
      %s329 = sld [smem:[#allocation6 + %s25]]
      %p330 = scmp.lt.s32.totalorder %s23, 1
      %s331 = scalar_select %p330, %s23, 1
      %p332 = scmp.lt.s32.totalorder %s24, 3
      %s333 = scalar_select %p332, %s24, 3
      %p334 = scmp.lt.s32.totalorder %s329, 0
      %s335 = scalar_select %p334, %s329, 0
      %s336 = sadd.s32 %s335, %s333
      %s337 = smul.addr %s331, 4
      %s338 = sadd.s32 %s336, %s337
      %s339 = smul.addr %s338, 4
      %s340 = scalar_lea.vmem %s5, %s339
      %s341 = sld [smem:[#allocation6 + %s25]]
      %s343 = sld [smem:[#allocation6 + %s25]]
      %s344 = sld [smem:[#allocation7 + %s25]]
      %p345 = scmp.eq.s32.totalorder %s344, 0
      // Predicated region
      $region33: #{causal_self_attention.4} parent=31 // pred_check
        %p346 = pneg %p345
      $region34: #{causal_self_attention.4} parent=31 // pred_check_branch
        %348 = sbr.rel (%p346) target = $region36
      $region35: #{causal_self_attention.4} parent=31 // pred_region
        %vm349 = vcmask 7168
        %350 = vst.msk [vmem:[#allocation2] sm:$0xff] %vm349, -inf
        %351 = vst.msk [vmem:[#allocation3] sm:$0xff] %vm349, 0.0
        %vm352 = vcmask 64512
        %353 = vst.msk [vmem:[#allocation4] sm:$0xff] %vm352, 0.0
      $region36: #{causal_self_attention.4} parent=31 // pred_fallthru
        _
      %s354 = smul.u32 %s344, 8
      %s355 = sadd.s32 %s354, 7
      %s356 = smul.u32 %s343, 8
      %p357 = scmp.gt.s32.totalorder %s355, %s356
      %p358 = scmp.le.s32.totalorder %s355, %s356
      // Predicated region
      $region37: #{causal_self_attention.4} parent=31 // pred_check
        %p359 = pneg %p358
      $region38: #{causal_self_attention.4} parent=31 // pred_check_branch
        %361 = sbr.rel (%p359) target = $region40
      $region39: #{causal_self_attention.4} parent=31 // pred_region
        %v362 = vld [vmem:[%s301] sm:$0xf]
        %v363 = vld [vmem:[%s314] sm:$0xf]
        %vm364 = vcmask 64512
        %v366 = vsel %vm364, %v362, 0
        %v369 = vsel %vm364, %v363, 0
        %371 = vmatpush.bf16.xpose.msra.mxu0 0
        %372 = vmatpush.bf16.xpose.msra.mxu0 0
        %373 = vmatpush.bf16.xpose.msra.mxu0 0
        %374 = vmatpush.bf16.xpose.msra.mxu0 0
        %375 = vmatpush.bf16.xpose.msra.mxu0 0
        %376 = vmatpush.bf16.xpose.msra.mxu0 0
        %377 = vmatpush.bf16.xpose.msra.mxu0 0
        %378 = vmatpush.bf16.xpose.msra.mxu0 %v369
        %379 = vmatmul.bf16.gmra.mxu0 %v366
        %v380 = vpop.f32.mrf.mxu0
        %v381 = vadd.f32 0.0, %v380
        %v382 = vpop.f32.mrf.mxu0
        %383 = vdwg.mxu0
        %v384 = vld [vmem:[#allocation2] sm:$0xff]
        %v385 = vsel %vm364, %v381, -inf
        %386 = vmax.xlane.f32.xlu0 %v385
        %v387 = vpop.xlane.xlu0 %386
        %v388 = vmax.f32 %v384, %v387
        %v389 = vsub.f32 %v384, %v388
        %v390 = vmul.f32 %v389, 1.442695
        %v391 = vpow.pop %v390
        %393 = vset.pattern.permute.xlu0 0
        %394 = vperm.xlu0 %393, %v388
        %v395 = vpop.permute.xlu0 %394
        %v397 = vsub.f32 %v381, %v395
        %v398 = vmul.f32 %v397, 1.442695
        %v399 = vpow.pop %v398
        %v400 = vld [vmem:[#allocation3] sm:$0xff]
        %v401 = vmul.f32 %v391, %v400
        %v402 = vsel %vm364, %v399, 0.0
        %403 = vadd.xlane.f32.xlu0 %v402
        %v404 = vpop.xlane.xlu0 %403
        %v405 = vadd.f32 %v401, %v404
        %vm406 = vcmask 7168
        %407 = vst.msk [vmem:[#allocation3] sm:$0xff] %vm406, %v405
        %v408 = vld [vmem:[%s327] sm:$0xf]
        %v409 = vld [vmem:[#allocation4] sm:$0xff]
        %411 = vset.pattern.permute.xlu0 0
        %412 = vperm.xlu0 %411, %v391
        %v413 = vpop.permute.xlu0 %412
        %v415 = vmul.f32 %v413, %v409
        %v416 = vpack.c.bf16 %v399, %v399
        %v418 = vsel %vm364, %v416, 0
        %vm420 = vcmask 1043456
        %v422 = vsel %vm420, %v408, 0
        %424 = vmatpush.bf16.msra.mxu0 0
        %425 = vmatpush.bf16.msra.mxu0 0
        %426 = vmatpush.bf16.msra.mxu0 0
        %427 = vmatpush.bf16.msra.mxu0 0
        %428 = vmatpush.bf16.msra.mxu0 0
        %429 = vmatpush.bf16.msra.mxu0 0
        %430 = vmatpush.bf16.msra.mxu0 0
        %431 = vmatpush.bf16.msra.mxu0 %v422
        %432 = vmatmul.bf16.gmra.mxu0 %v418
        %v433 = vpop.f32.mrf.mxu0
        %v434 = vadd.f32 0.0, %v433
        %v435 = vpop.f32.mrf.mxu0
        %436 = vdwg.mxu0
        %v437 = vadd.f32 %v415, %v434
        %438 = vst.msk [vmem:[#allocation4] sm:$0xff] %vm364, %v437
        %439 = vst.msk [vmem:[#allocation2] sm:$0xff] %vm406, %v388
      $region40: #{causal_self_attention.4} parent=31 // pred_fallthru
        _
      // Predicated region
      $region41: #{causal_self_attention.4} parent=31 // pred_check
        %p440 = pneg %p357
      $region42: #{causal_self_attention.4} parent=31 // pred_check_branch
        %442 = sbr.rel (%p440) target = $region44
      $region43: #{causal_self_attention.4} parent=31 // pred_region
        %v443 = vld [vmem:[%s301] sm:$0xf]
        %v444 = vld [vmem:[%s314] sm:$0xf]
        %vm445 = vcmask 64512
        %v447 = vsel %vm445, %v443, 0
        %v450 = vsel %vm445, %v444, 0
        %452 = vmatpush.bf16.xpose.msra.mxu0 0
        %453 = vmatpush.bf16.xpose.msra.mxu0 0
        %454 = vmatpush.bf16.xpose.msra.mxu0 0
        %455 = vmatpush.bf16.xpose.msra.mxu0 0
        %456 = vmatpush.bf16.xpose.msra.mxu0 0
        %457 = vmatpush.bf16.xpose.msra.mxu0 0
        %458 = vmatpush.bf16.xpose.msra.mxu0 0
        %459 = vmatpush.bf16.xpose.msra.mxu0 %v450
        %460 = vmatmul.bf16.gmra.mxu0 %v447
        %v461 = vpop.f32.mrf.mxu0
        %v462 = vadd.f32 0.0, %v461
        %v463 = vpop.f32.mrf.mxu0
        %464 = vdwg.mxu0
        %v465 = vlaneseq
        %v466 = vshrl.u32 %v465, 7
        %v467 = vstv %s356
        %v468 = vadd.s32 %v467, %v466
        %v469 = vlaneseq
        %v470 = vand.u32 %v469, 127
        %v471 = vstv %s354
        %v472 = vadd.s32 %v471, %v470
        %vm473 = vcmp.le.s32.totalorder %v472, %v468
        %v474 = vsel %vm473, %v462, -inf
        %v475 = vld [vmem:[#allocation2] sm:$0xff]
        %v476 = vsel %vm445, %v474, -inf
        %477 = vmax.xlane.f32.xlu0 %v476
        %v478 = vpop.xlane.xlu0 %477
        %v479 = vmax.f32 %v475, %v478
        %v480 = vsub.f32 %v475, %v479
        %v481 = vmul.f32 %v480, 1.442695
        %v482 = vpow.pop %v481
        %484 = vset.pattern.permute.xlu0 0
        %485 = vperm.xlu0 %484, %v479
        %v486 = vpop.permute.xlu0 %485
        %v488 = vsub.f32 %v474, %v486
        %v489 = vmul.f32 %v488, 1.442695
        %v490 = vpow.pop %v489
        %v491 = vld [vmem:[#allocation3] sm:$0xff]
        %v492 = vmul.f32 %v482, %v491
        %v493 = vsel %vm445, %v490, 0.0
        %494 = vadd.xlane.f32.xlu0 %v493
        %v495 = vpop.xlane.xlu0 %494
        %v496 = vadd.f32 %v492, %v495
        %vm497 = vcmask 7168
        %498 = vst.msk [vmem:[#allocation3] sm:$0xff] %vm497, %v496
        %v499 = vld [vmem:[%s327] sm:$0xf]
        %v500 = vld [vmem:[#allocation4] sm:$0xff]
        %502 = vset.pattern.permute.xlu0 0
        %503 = vperm.xlu0 %502, %v482
        %v504 = vpop.permute.xlu0 %503
        %v506 = vmul.f32 %v504, %v500
        %v507 = vpack.c.bf16 %v490, %v490
        %v509 = vsel %vm445, %v507, 0
        %vm511 = vcmask 1043456
        %v513 = vsel %vm511, %v499, 0
        %515 = vmatpush.bf16.msra.mxu0 0
        %516 = vmatpush.bf16.msra.mxu0 0
        %517 = vmatpush.bf16.msra.mxu0 0
        %518 = vmatpush.bf16.msra.mxu0 0
        %519 = vmatpush.bf16.msra.mxu0 0
        %520 = vmatpush.bf16.msra.mxu0 0
        %521 = vmatpush.bf16.msra.mxu0 0
        %522 = vmatpush.bf16.msra.mxu0 %v513
        %523 = vmatmul.bf16.gmra.mxu0 %v509
        %v524 = vpop.f32.mrf.mxu0
        %v525 = vadd.f32 0.0, %v524
        %v526 = vpop.f32.mrf.mxu0
        %527 = vdwg.mxu0
        %v528 = vadd.f32 %v506, %v525
        %529 = vst.msk [vmem:[#allocation4] sm:$0xff] %vm445, %v528
        %530 = vst.msk [vmem:[#allocation2] sm:$0xff] %vm497, %v479
      $region44: #{causal_self_attention.4} parent=31 // pred_fallthru
        _
      %s531 = sadd.s32 %s344, 1
      %s532 = smul.u32 %s531, 8
      %s533 = sadd.s32 %s343, 1
      %s534 = smul.u32 %s533, 8
      %p535 = scmp.ge.s32.totalorder %s532, %s534
      // Predicated region
      $region45: #{causal_self_attention.4} parent=31 // pred_check
        %p536 = pneg %p535
      $region46: #{causal_self_attention.4} parent=31 // pred_check_branch
        %538 = sbr.rel (%p536) target = $region48
      $region47: #{causal_self_attention.4} parent=31 // pred_region
        %v539 = vld [vmem:[#allocation3] sm:$0xff]
        %v540 = vrcp.pop %v539
        %v541 = vld [vmem:[#allocation4] sm:$0xff]
        %543 = vset.pattern.permute.xlu0 0
        %544 = vperm.xlu0 %543, %v540
        %v545 = vpop.permute.xlu0 %544
        %v547 = vmul.f32 %v541, %v545
        %v548 = vpack.c.bf16 %v547, %v547
        %vm549 = vcmask 60416
        %550 = vst.msk [vmem:[%s340] sm:$0xf] %vm549, %v548
      $region48: #{causal_self_attention.4} parent=31 // pred_fallthru
        _
      %s551 = sld [smem:[#allocation6 + %s25]]
      %p552 = scmp.lt.s32.totalorder %s23, 1
      %s553 = scalar_select %p552, %s23, 1
      %p554 = scmp.lt.s32.totalorder %s24, 3
      %s555 = scalar_select %p554, %s24, 3
      %p556 = scmp.lt.s32.totalorder %s551, 0
      %s557 = scalar_select %p556, %s551, 0
      %s558 = sadd.s32 %s557, %s555
      %s559 = smul.addr %s553, 4
      %s560 = sadd.s32 %s558, %s559
      %s561 = smul.addr %s560, 4
      %s562 = scalar_lea.vmem %s5, %s561
      // Predicated region
      $region49: #{causal_self_attention.4} parent=31 // pred_check
        %p563 = pneg %p157
      $region50: #{causal_self_attention.4} parent=31 // pred_check_branch
        %565 = sbr.rel (%p563) target = $region52
      $region51: #{causal_self_attention.4} parent=31 // pred_region
        %s566 = sld [smem:[#allocation6 + %s25]]
      $region52: #{causal_self_attention.4} parent=31 // pred_fallthru
        _
    $region32: #{causal_self_attention.4} parent=5 // pred_fallthru
      _
    %p567 = scmp.le.s32.totalorder 2, %s13
    // Predicated region
    $region53: #{causal_self_attention.4} parent=5 // pred_check
      %p568 = pneg %p567
    $region54: #{causal_self_attention.4} parent=5 // pred_check_branch
      %570 = sbr.rel (%p568) target = $region56
    $region55: #{causal_self_attention.4} parent=5 // pred_region
      %s571 = ssub.s32 %s13, 2
      // Predicated region
      $region57: #{causal_self_attention.4} parent=55 // pred_check
        %p572 = pneg %p163
      $region58: #{causal_self_attention.4} parent=55 // pred_check_branch
        %574 = sbr.rel (%p572) target = $region60
      $region59: #{causal_self_attention.4} parent=55 // pred_region
        %s575 = sld [smem:[#allocation6 + %s28]]
        %p576 = scmp.lt.s32.totalorder %s26, 1
        %s577 = scalar_select %p576, %s26, 1
        %p578 = scmp.lt.s32.totalorder %s27, 3
        %s579 = scalar_select %p578, %s27, 3
        %p580 = scmp.lt.s32.totalorder %s575, 0
        %s581 = scalar_select %p580, %s575, 0
        %s582 = sadd.s32 %s581, %s579
        %s583 = smul.addr %s577, 4
        %s584 = sadd.s32 %s582, %s583
        %s585 = smul.addr %s584, 4
        %s586 = scalar_lea.vmem %s5, %s585
      $region60: #{causal_self_attention.4} parent=55 // pred_fallthru
        _
    $region56: #{causal_self_attention.4} parent=5 // pred_fallthru
      _
  $region6: #{causal_self_attention.4} parent=0 // loop_footer
    %s17 = sadd.s32 1, %s13
  $region7: #{causal_self_attention.4} parent=0 // loop_footer_branch
    %12 = sbr.rel target = $region3
  $region8: #{causal_self_attention.4} parent=0 // loop_exit
    _

</llo_original>
